<compile_context>
chip_gen: v7x
topology: tpu7x:2x2x1
jax: 0.10.0
libtpu: 0.0.40
codegen_flags: <defaults>
</compile_context>

<pallas_src>
import functools
import numpy as np
import jax
import jax.numpy as jnp
from jax import lax
from jax.experimental import pallas as pl
from jax.experimental.pallas import tpu as pltpu


# ----------------------------------------------------------------------------
# kernel
# ----------------------------------------------------------------------------
def _ucb_kernel(s_ref, x2_ref, ra_ref, rb_ref, rc_ref, c_ref, mask_ref,
                g1_ref, b1_ref, g2_ref, b2_ref, o_ref, pad_ref,
                *, Rv, eps, inv_cnt):
    Rp = Rv + 2
    mask = mask_ref[...]                                   # (Rv, 1) zero at pad rows

    def shifted(ref):
        # padded (Rp, L) ref -> (Rv, 3L): lane-concat of the 3 row-shifted views
        return jnp.concatenate([ref[0:Rv], ref[1:Rv + 1], ref[2:Rv + 2]], axis=1)

    # ---- ConvTranspose2d == 3x3 conv (flipped kernel) on the zero-stuffed x1;
    #      one fused K = 3*W2*IF matmul over the whole batch slab --------------
    u1 = jnp.dot(shifted(s_ref), ra_ref[...],
                 preferred_element_type=jnp.float32) * mask          # (Rv, W2*OF)

    # ---- step2 conv #1 on cat([u1, x2], channel): weight split per channel
    #      group, everything fused into ONE K = 6*W2*OF matmul -----------------
    pad_ref[...] = jnp.zeros_like(pad_ref)       # pad rows stay zero from here on
    pad_ref[1:Rp - 1, :] = u1
    a_in = jnp.concatenate([shifted(pad_ref), shifted(x2_ref)], axis=1)
    y1 = jnp.dot(a_in, rb_ref[...], preferred_element_type=jnp.float32)
    y1 = jnp.maximum(y1, 0.0) * mask                                  # ReLU, re-zero pads

    # ---- BatchNorm2d #1 (training-mode batch stats per channel) --------------
    s12 = jnp.concatenate([jnp.sum(y1, axis=0, keepdims=True),
                           jnp.sum(y1 * y1, axis=0, keepdims=True)], axis=0)
    st = jnp.dot(s12, c_ref[...], preferred_element_type=jnp.float32) * inv_cnt
    mu1 = st[0:1]
    var1 = st[1:2] - mu1 * mu1
    z1 = ((y1 - mu1) * (lax.rsqrt(var1 + eps) * g1_ref[...]) + b1_ref[...]) * mask

    # ---- step2 conv #2: one fused K = 3*W2*OF matmul --------------------------
    pad_ref[1:Rp - 1, :] = z1
    y2 = jnp.dot(shifted(pad_ref), rc_ref[...],
                 preferred_element_type=jnp.float32) * mask

    # ---- BatchNorm2d #2 then ReLU --------------------------------------------
    t12 = jnp.concatenate([jnp.sum(y2, axis=0, keepdims=True),
                           jnp.sum(y2 * y2, axis=0, keepdims=True)], axis=0)
    tt = jnp.dot(t12, c_ref[...], preferred_element_type=jnp.float32) * inv_cnt
    mu2 = tt[0:1]
    var2 = tt[1:2] - mu2 * mu2
    z2 = (y2 - mu2) * (lax.rsqrt(var2 + eps) * g2_ref[...]) + b2_ref[...]
    o_ref[...] = jnp.maximum(z2, 0.0)


# ----------------------------------------------------------------------------
# trace-time constant builders (numpy)
# ----------------------------------------------------------------------------
def _build_fused_shift_mat(k, W):
    """k: (Cout, Cin, 3, 3) OIHW correlation weight (pad=1) ->
       (3*W*Cin, W*Cout): the 3 row-shift blocks stacked along K (dh = 0,1,2)."""
    k = np.asarray(k, np.float32)
    cout, cin = k.shape[0], k.shape[1]
    R = np.zeros((3, W * cin, W * cout), np.float32)
    for dh in range(3):
        for dw in range(3):
            blk = k[:, :, dh, dw].T                       # (Cin, Cout)
            for wo in range(W):
                wi = wo + dw - 1                          # horizontal pad=1 baked in
                if 0 <= wi < W:
                    R[dh, wi * cin:(wi + 1) * cin, wo * cout:(wo + 1) * cout] = blk
    return R.reshape(3 * W * cin, W * cout)


# ----------------------------------------------------------------------------
# wrapper
# ----------------------------------------------------------------------------
def ucb_old_forward(x1, x2, w_ct, w_a, g1, b1, w_b, g2, b2, eps=1e-5):
    N, IF, H1, W1 = x1.shape
    OF = int(w_ct.shape[1])
    H2, W2 = 2 * H1, 2 * W1
    assert x2.shape == (N, OF, H2, W2)
    Rp = N * (H2 + 1) + 1          # padded rows: 1 + per-sample (H2 data + 1 pad)
    Rv = Rp - 2                    # rows the kernel computes
    L = W2 * OF

    # ---------------- wrapper-side layout plumbing (no math) ----------------
    x1_nhwc = jnp.transpose(x1, (0, 2, 3, 1)).astype(jnp.float32)     # (N,H1,W1,IF)
    stuffed = jnp.zeros((N, H2, W2, IF), jnp.float32)
    stuffed = stuffed.at[:, ::2, ::2, :].set(x1_nhwc)                 # zero-stuffed x1
    s2d = stuffed.reshape(N, H2, W2 * IF)
    x2_2d = jnp.transpose(x2, (0, 2, 3, 1)).astype(jnp.float32).reshape(N, H2, L)

    def to_padded(a):   # (N, H2, C) -> (Rp, C): top pad, then per sample H2 rows + pad
        C = a.shape[-1]
        z = jnp.zeros((N, 1, C), jnp.float32)
        body = jnp.concatenate([a, z], axis=1).reshape(N * (H2 + 1), C)
        return jnp.concatenate([jnp.zeros((1, C), jnp.float32), body], axis=0)

    s_pad = to_padded(s2d)                      # (Rp, W2*IF)
    x2_pad = to_padded(x2_2d)                   # (Rp, W2*OF)

    # ---------------- trace-time constants ----------------
    # ConvTranspose(stride 2, pad 1, out_pad 1) == conv3x3 with flipped kernel
    # on the zero-stuffed input.
    k_eq = np.transpose(np.asarray(w_ct, np.float32), (1, 0, 2, 3))[:, :, ::-1, ::-1]
    RA = _build_fused_shift_mat(k_eq, W2)                               # (3*W2*IF, L)
    w_a_np = np.asarray(w_a, np.float32)
    RB = np.concatenate([_build_fused_shift_mat(w_a_np[:, :OF], W2),    # acts on u1
                         _build_fused_shift_mat(w_a_np[:, OF:], W2)],   # acts on x2
                        axis=0)                                         # (6*W2*OF, L)
    RC = _build_fused_shift_mat(np.asarray(w_b, np.float32), W2)        # (3*W2*OF, L)
    # per-channel pooling matrix: lane w*OF+c -> sum over all w of that channel
    Cmat = np.kron(np.ones((W2, W2), np.float32), np.eye(OF, dtype=np.float32))
    mask = np.ones((Rv, 1), np.float32)
    for n in range(1, N):
        mask[n * (H2 + 1) - 1, 0] = 0.0        # zero the inter-sample pad rows
    g1l = np.tile(np.asarray(g1, np.float32), W2)[None, :]
    b1l = np.tile(np.asarray(b1, np.float32), W2)[None, :]
    g2l = np.tile(np.asarray(g2, np.float32), W2)[None, :]
    b2l = np.tile(np.asarray(b2, np.float32), W2)[None, :]

    kernel = functools.partial(_ucb_kernel, Rv=Rv, eps=eps,
                               inv_cnt=1.0 / float(N * H2 * W2))
    args = (s_pad, x2_pad, jnp.asarray(RA), jnp.asarray(RB), jnp.asarray(RC),
            jnp.asarray(Cmat), jnp.asarray(mask),
            jnp.asarray(g1l), jnp.asarray(b1l), jnp.asarray(g2l), jnp.asarray(b2l))
    full = lambda a: pl.BlockSpec(a.shape, lambda i: (0, 0))

    out = pl.pallas_call(
        kernel,
        out_shape=jax.ShapeDtypeStruct((Rv, L), jnp.float32),
        grid=(1,),
        in_specs=[full(a) for a in args],
        out_specs=pl.BlockSpec((Rv, L), lambda i: (0, 0)),
        scratch_shapes=[pltpu.VMEM((Rp, L), jnp.float32)],
        compiler_params=pltpu.CompilerParams(dimension_semantics=("arbitrary",)),
    )(*args)

    # ---------------- wrapper-side output unpacking ----------------
    rows = (np.arange(N)[:, None] * (H2 + 1) + np.arange(H2)[None, :]).reshape(-1)
    y = out[rows].reshape(N, H2, W2, OF)
    return jnp.transpose(y, (0, 3, 1, 2))                  # NCHW like PyTorch


# ----------------------------------------------------------------------------
# pure-JAX reference (PyTorch semantics, training-mode BatchNorm)
# ----------------------------------------------------------------------------
def ucb_old_reference(x1, x2, w_ct, w_a, g1, b1, w_b, g2, b2, eps=1e-5):
    dn = ('NCHW', 'OIHW', 'NCHW')
    hp = lax.Precision.HIGHEST
    k_eq = jnp.transpose(w_ct, (1, 0, 2, 3))[:, :, ::-1, ::-1]
    u1 = lax.conv_general_dilated(x1, k_eq, window_strides=(1, 1),
                                  padding=((1, 2), (1, 2)), lhs_dilation=(2, 2),
                                  dimension_numbers=dn, precision=hp)
    x = jnp.concatenate([u1, x2], axis=1)

    def bn(t, g, b):
        mu = jnp.mean(t, axis=(0, 2, 3), keepdims=True)
        var = jnp.mean(jnp.square(t - mu), axis=(0, 2, 3), keepdims=True)
        return (t - mu) * lax.rsqrt(var + eps) * g[None, :, None, None] \
               + b[None, :, None, None]

    y = lax.conv_general_dilated(x, w_a, (1, 1), ((1, 1), (1, 1)),
                                 dimension_numbers=dn, precision=hp)
    y = jnp.maximum(y, 0.0)
    y = bn(y, g1, b1)
    y = lax.conv_general_dilated(y, w_b, (1, 1), ((1, 1), (1, 1)),
                                 dimension_numbers=dn, precision=hp)
    y = bn(y, g2, b2)
    return jnp.maximum(y, 0.0)


if __name__ == "__main__":
    # args: kernel_size=3, IF=4, OF=8; x1 at (8,8), x2 at the upsampled (16,16)
    N, IF, OF, H1, W1 = 2, 4, 8, 8, 8
    H2, W2 = 2 * H1, 2 * W1
    key = jax.random.PRNGKey(0)
    ks = jax.random.split(key, 9)
    x1 = jax.random.normal(ks[0], (N, IF, H1, W1), jnp.float32)
    x2 = jax.random.normal(ks[1], (N, OF, H2, W2), jnp.float32)
    w_ct = 0.1 * jax.random.normal(ks[2], (IF, OF, 3, 3), jnp.float32)      # ConvTranspose2d weight
    w_a = 0.1 * jax.random.normal(ks[3], (OF, 2 * OF, 3, 3), jnp.float32)   # Conv2d(2*OF, OF, 3)
    w_b = 0.1 * jax.random.normal(ks[4], (OF, OF, 3, 3), jnp.float32)       # Conv2d(OF, OF, 3)
    g1 = 1.0 + 0.1 * jax.random.normal(ks[5], (OF,), jnp.float32)           # BatchNorm2d #1 affine
    b1 = 0.1 * jax.random.normal(ks[6], (OF,), jnp.float32)
    g2 = 1.0 + 0.1 * jax.random.normal(ks[7], (OF,), jnp.float32)           # BatchNorm2d #2 affine
    b2 = 0.1 * jax.random.normal(ks[8], (OF,), jnp.float32)

    out = jax.block_until_ready(ucb_old_forward(x1, x2, w_ct, w_a, g1, b1, w_b, g2, b2))
    ref = ucb_old_reference(x1, x2, w_ct, w_a, g1, b1, w_b, g2, b2)
    assert out.shape == (N, OF, H2, W2), out.shape
    err = float(jnp.max(jnp.abs(out - ref)))
    if err > 1e-2:
        raise AssertionError(f"mismatch vs reference: max abs err {err}")
    print("KERNEL_OK")
</pallas_src>

<mosaic_0001>
module attributes {stable_mosaic.version = 11 : i64} {
  func.func @_ucb_kernel(%arg0: i32, %arg1: memref<35x64xf32, #tpu.memory_space<vmem>>, %arg2: memref<35x128xf32, #tpu.memory_space<vmem>>, %arg3: memref<192x128xf32, #tpu.memory_space<vmem>>, %arg4: memref<768x128xf32, #tpu.memory_space<vmem>>, %arg5: memref<384x128xf32, #tpu.memory_space<vmem>>, %arg6: memref<128x128xf32, #tpu.memory_space<vmem>>, %arg7: memref<33x1xf32, #tpu.memory_space<vmem>>, %arg8: memref<1x128xf32, #tpu.memory_space<vmem>>, %arg9: memref<1x128xf32, #tpu.memory_space<vmem>>, %arg10: memref<1x128xf32, #tpu.memory_space<vmem>>, %arg11: memref<1x128xf32, #tpu.memory_space<vmem>>, %arg12: memref<33x128xf32, #tpu.memory_space<vmem>>, %arg13: memref<35x128xf32, #tpu.memory_space<vmem>>) attributes {dimension_semantics = [#tpu.dimension_semantics<arbitrary>], iteration_bounds = array<i64: 1>, scalar_prefetch = 0 : i64, scratch_operands = 1 : i64, tpu.core_type = #tpu.core_type<tc>, window_params = [{pipeline_mode = #tpu.pipeline_mode<synchronous>, transform_indices = @transform_0, window_bounds = array<i64: 35, 64>}, {pipeline_mode = #tpu.pipeline_mode<synchronous>, transform_indices = @transform_1, window_bounds = array<i64: 35, 128>}, {pipeline_mode = #tpu.pipeline_mode<synchronous>, transform_indices = @transform_2, window_bounds = array<i64: 192, 128>}, {pipeline_mode = #tpu.pipeline_mode<synchronous>, transform_indices = @transform_3, window_bounds = array<i64: 768, 128>}, {pipeline_mode = #tpu.pipeline_mode<synchronous>, transform_indices = @transform_4, window_bounds = array<i64: 384, 128>}, {pipeline_mode = #tpu.pipeline_mode<synchronous>, transform_indices = @transform_5, window_bounds = array<i64: 128, 128>}, {pipeline_mode = #tpu.pipeline_mode<synchronous>, transform_indices = @transform_6, window_bounds = array<i64: 33, 1>}, {pipeline_mode = #tpu.pipeline_mode<synchronous>, transform_indices = @transform_7, window_bounds = array<i64: 1, 128>}, {pipeline_mode = #tpu.pipeline_mode<synchronous>, transform_indices = @transform_8, window_bounds = array<i64: 1, 128>}, {pipeline_mode = #tpu.pipeline_mode<synchronous>, transform_indices = @transform_9, window_bounds = array<i64: 1, 128>}, {pipeline_mode = #tpu.pipeline_mode<synchronous>, transform_indices = @transform_10, window_bounds = array<i64: 1, 128>}, {pipeline_mode = #tpu.pipeline_mode<synchronous>, transform_indices = @transform_11, window_bounds = array<i64: 33, 128>}]} {
    %c0 = arith.constant 0 : index
    %c0_0 = arith.constant 0 : index
    %0 = vector.load %arg7[%c0, %c0_0] : memref<33x1xf32, #tpu.memory_space<vmem>>, vector<33x1xf32>
    %c0_1 = arith.constant 0 : index
    %c0_2 = arith.constant 0 : index
    %1 = vector.load %arg1[%c0_1, %c0_2] : memref<35x64xf32, #tpu.memory_space<vmem>>, vector<33x64xf32>
    %c1 = arith.constant 1 : index
    %c0_3 = arith.constant 0 : index
    %2 = vector.load %arg1[%c1, %c0_3] : memref<35x64xf32, #tpu.memory_space<vmem>>, vector<33x64xf32>
    %c2 = arith.constant 2 : index
    %c0_4 = arith.constant 0 : index
    %3 = vector.load %arg1[%c2, %c0_4] : memref<35x64xf32, #tpu.memory_space<vmem>>, vector<33x64xf32>
    %4 = tpu.concatenate %1, %2, %3 in 1 : vector<33x64xf32>, vector<33x64xf32>, vector<33x64xf32> -> vector<33x192xf32>
    %c0_5 = arith.constant 0 : index
    %c0_6 = arith.constant 0 : index
    %5 = vector.load %arg3[%c0_5, %c0_6] : memref<192x128xf32, #tpu.memory_space<vmem>>, vector<192x128xf32>
    %cst = arith.constant dense<0.000000e+00> : vector<33x128xf32>
    %6 = tpu.matmul %4, %5, %cst {dimension_numbers = #tpu.dot_dimension_numbers<[1], [0], [0], [1], [0, 0, 1, 1], [], []>} : vector<33x192xf32>, vector<192x128xf32>, vector<33x128xf32> -> vector<33x128xf32>
    %7 = vector.broadcast %0 : vector<33x1xf32> to vector<33x128xf32>
    %8 = arith.mulf %6, %7 : vector<33x128xf32>
    %cst_7 = arith.constant 0.000000e+00 : f32
    %9 = vector.broadcast %cst_7 : f32 to vector<35x128xf32>
    %c0_8 = arith.constant 0 : index
    %c0_9 = arith.constant 0 : index
    %10 = vector.load %arg13[%c0_8, %c0_9] : memref<35x128xf32, #tpu.memory_space<vmem>>, vector<35x128xf32>
    tpu.vector_store %arg13[%c0_8, %c0_9], %9 {strides = array<i32>} : memref<35x128xf32, #tpu.memory_space<vmem>>, vector<35x128xf32>,
    %c1_10 = arith.constant 1 : index
    %c0_11 = arith.constant 0 : index
    %11 = vector.load %arg13[%c1_10, %c0_11] : memref<35x128xf32, #tpu.memory_space<vmem>>, vector<33x128xf32>
    tpu.vector_store %arg13[%c1_10, %c0_11], %8 {strides = array<i32>} : memref<35x128xf32, #tpu.memory_space<vmem>>, vector<33x128xf32>,
    %c0_12 = arith.constant 0 : index
    %c0_13 = arith.constant 0 : index
    %12 = vector.load %arg13[%c0_12, %c0_13] : memref<35x128xf32, #tpu.memory_space<vmem>>, vector<33x128xf32>
    %c1_14 = arith.constant 1 : index
    %c0_15 = arith.constant 0 : index
    %13 = vector.load %arg13[%c1_14, %c0_15] : memref<35x128xf32, #tpu.memory_space<vmem>>, vector<33x128xf32>
    %c2_16 = arith.constant 2 : index
    %c0_17 = arith.constant 0 : index
    %14 = vector.load %arg13[%c2_16, %c0_17] : memref<35x128xf32, #tpu.memory_space<vmem>>, vector<33x128xf32>
    %15 = tpu.concatenate %12, %13, %14 in 1 : vector<33x128xf32>, vector<33x128xf32>, vector<33x128xf32> -> vector<33x384xf32>
    %c0_18 = arith.constant 0 : index
    %c0_19 = arith.constant 0 : index
    %16 = vector.load %arg2[%c0_18, %c0_19] : memref<35x128xf32, #tpu.memory_space<vmem>>, vector<33x128xf32>
    %c1_20 = arith.constant 1 : index
    %c0_21 = arith.constant 0 : index
    %17 = vector.load %arg2[%c1_20, %c0_21] : memref<35x128xf32, #tpu.memory_space<vmem>>, vector<33x128xf32>
    %c2_22 = arith.constant 2 : index
    %c0_23 = arith.constant 0 : index
    %18 = vector.load %arg2[%c2_22, %c0_23] : memref<35x128xf32, #tpu.memory_space<vmem>>, vector<33x128xf32>
    %19 = tpu.concatenate %16, %17, %18 in 1 : vector<33x128xf32>, vector<33x128xf32>, vector<33x128xf32> -> vector<33x384xf32>
    %20 = tpu.concatenate %15, %19 in 1 : vector<33x384xf32>, vector<33x384xf32> -> vector<33x768xf32>
    %c0_24 = arith.constant 0 : index
    %c0_25 = arith.constant 0 : index
    %21 = vector.load %arg4[%c0_24, %c0_25] : memref<768x128xf32, #tpu.memory_space<vmem>>, vector<768x128xf32>
    %cst_26 = arith.constant dense<0.000000e+00> : vector<33x128xf32>
    %22 = tpu.matmul %20, %21, %cst_26 {dimension_numbers = #tpu.dot_dimension_numbers<[1], [0], [0], [1], [0, 0, 1, 1], [], []>} : vector<33x768xf32>, vector<768x128xf32>, vector<33x128xf32> -> vector<33x128xf32>
    %cst_27 = arith.constant 0.000000e+00 : f32
    %23 = vector.broadcast %cst_27 : f32 to vector<33x128xf32>
    %24 = arith.maximumf %22, %23 : vector<33x128xf32>
    %25 = vector.broadcast %0 : vector<33x1xf32> to vector<33x128xf32>
    %26 = arith.mulf %24, %25 : vector<33x128xf32>
    %cst_28 = arith.constant dense<0.000000e+00> : vector<128xf32>
    %27 = vector.multi_reduction <add>, %26, %cst_28 [0] : vector<33x128xf32> to vector<128xf32>
    %28 = vector.shape_cast %27 : vector<128xf32> to vector<1x128xf32>
    %29 = arith.mulf %26, %26 : vector<33x128xf32>
    %cst_29 = arith.constant dense<0.000000e+00> : vector<128xf32>
    %30 = vector.multi_reduction <add>, %29, %cst_29 [0] : vector<33x128xf32> to vector<128xf32>
    %31 = vector.shape_cast %30 : vector<128xf32> to vector<1x128xf32>
    %32 = tpu.concatenate %28, %31 in 0 : vector<1x128xf32>, vector<1x128xf32> -> vector<2x128xf32>
    %c0_30 = arith.constant 0 : index
    %c0_31 = arith.constant 0 : index
    %33 = vector.load %arg6[%c0_30, %c0_31] : memref<128x128xf32, #tpu.memory_space<vmem>>, vector<128x128xf32>
    %cst_32 = arith.constant dense<0.000000e+00> : vector<2x128xf32>
    %34 = tpu.matmul %32, %33, %cst_32 {dimension_numbers = #tpu.dot_dimension_numbers<[1], [0], [0], [1], [0, 0, 1, 1], [], []>} : vector<2x128xf32>, vector<128x128xf32>, vector<2x128xf32> -> vector<2x128xf32>
    %cst_33 = arith.constant 0.001953125 : f32
    %35 = vector.broadcast %cst_33 : f32 to vector<2x128xf32>
    %36 = arith.mulf %34, %35 : vector<2x128xf32>
    %37 = vector.extract_strided_slice %36 {offsets = [0, 0], sizes = [1, 128], strides = [1, 1]} : vector<2x128xf32> to vector<1x128xf32>
    %38 = vector.extract_strided_slice %36 {offsets = [1, 0], sizes = [1, 128], strides = [1, 1]} : vector<2x128xf32> to vector<1x128xf32>
    %39 = arith.mulf %37, %37 : vector<1x128xf32>
    %40 = arith.subf %38, %39 : vector<1x128xf32>
    %41 = vector.broadcast %37 : vector<1x128xf32> to vector<33x128xf32>
    %42 = arith.subf %26, %41 : vector<33x128xf32>
    %cst_34 = arith.constant 9.99999974E-6 : f32
    %43 = vector.broadcast %cst_34 : f32 to vector<1x128xf32>
    %44 = arith.addf %40, %43 : vector<1x128xf32>
    %45 = math.rsqrt %44 : vector<1x128xf32>
    %c0_35 = arith.constant 0 : index
    %c0_36 = arith.constant 0 : index
    %46 = vector.load %arg8[%c0_35, %c0_36] : memref<1x128xf32, #tpu.memory_space<vmem>>, vector<1x128xf32>
    %47 = arith.mulf %45, %46 : vector<1x128xf32>
    %48 = vector.broadcast %47 : vector<1x128xf32> to vector<33x128xf32>
    %49 = arith.mulf %42, %48 : vector<33x128xf32>
    %c0_37 = arith.constant 0 : index
    %c0_38 = arith.constant 0 : index
    %50 = vector.load %arg9[%c0_37, %c0_38] : memref<1x128xf32, #tpu.memory_space<vmem>>, vector<1x128xf32>
    %51 = vector.broadcast %50 : vector<1x128xf32> to vector<33x128xf32>
    %52 = arith.addf %49, %51 : vector<33x128xf32>
    %53 = vector.broadcast %0 : vector<33x1xf32> to vector<33x128xf32>
    %54 = arith.mulf %52, %53 : vector<33x128xf32>
    %c1_39 = arith.constant 1 : index
    %c0_40 = arith.constant 0 : index
    %55 = vector.load %arg13[%c1_39, %c0_40] : memref<35x128xf32, #tpu.memory_space<vmem>>, vector<33x128xf32>
    tpu.vector_store %arg13[%c1_39, %c0_40], %54 {strides = array<i32>} : memref<35x128xf32, #tpu.memory_space<vmem>>, vector<33x128xf32>,
    %c0_41 = arith.constant 0 : index
    %c0_42 = arith.constant 0 : index
    %56 = vector.load %arg13[%c0_41, %c0_42] : memref<35x128xf32, #tpu.memory_space<vmem>>, vector<33x128xf32>
    %c1_43 = arith.constant 1 : index
    %c0_44 = arith.constant 0 : index
    %57 = vector.load %arg13[%c1_43, %c0_44] : memref<35x128xf32, #tpu.memory_space<vmem>>, vector<33x128xf32>
    %c2_45 = arith.constant 2 : index
    %c0_46 = arith.constant 0 : index
    %58 = vector.load %arg13[%c2_45, %c0_46] : memref<35x128xf32, #tpu.memory_space<vmem>>, vector<33x128xf32>
    %59 = tpu.concatenate %56, %57, %58 in 1 : vector<33x128xf32>, vector<33x128xf32>, vector<33x128xf32> -> vector<33x384xf32>
    %c0_47 = arith.constant 0 : index
    %c0_48 = arith.constant 0 : index
    %60 = vector.load %arg5[%c0_47, %c0_48] : memref<384x128xf32, #tpu.memory_space<vmem>>, vector<384x128xf32>
    %cst_49 = arith.constant dense<0.000000e+00> : vector<33x128xf32>
    %61 = tpu.matmul %59, %60, %cst_49 {dimension_numbers = #tpu.dot_dimension_numbers<[1], [0], [0], [1], [0, 0, 1, 1], [], []>} : vector<33x384xf32>, vector<384x128xf32>, vector<33x128xf32> -> vector<33x128xf32>
    %62 = vector.broadcast %0 : vector<33x1xf32> to vector<33x128xf32>
    %63 = arith.mulf %61, %62 : vector<33x128xf32>
    %cst_50 = arith.constant dense<0.000000e+00> : vector<128xf32>
    %64 = vector.multi_reduction <add>, %63, %cst_50 [0] : vector<33x128xf32> to vector<128xf32>
    %65 = vector.shape_cast %64 : vector<128xf32> to vector<1x128xf32>
    %66 = arith.mulf %63, %63 : vector<33x128xf32>
    %cst_51 = arith.constant dense<0.000000e+00> : vector<128xf32>
    %67 = vector.multi_reduction <add>, %66, %cst_51 [0] : vector<33x128xf32> to vector<128xf32>
    %68 = vector.shape_cast %67 : vector<128xf32> to vector<1x128xf32>
    %69 = tpu.concatenate %65, %68 in 0 : vector<1x128xf32>, vector<1x128xf32> -> vector<2x128xf32>
    %c0_52 = arith.constant 0 : index
    %c0_53 = arith.constant 0 : index
    %70 = vector.load %arg6[%c0_52, %c0_53] : memref<128x128xf32, #tpu.memory_space<vmem>>, vector<128x128xf32>
    %cst_54 = arith.constant dense<0.000000e+00> : vector<2x128xf32>
    %71 = tpu.matmul %69, %70, %cst_54 {dimension_numbers = #tpu.dot_dimension_numbers<[1], [0], [0], [1], [0, 0, 1, 1], [], []>} : vector<2x128xf32>, vector<128x128xf32>, vector<2x128xf32> -> vector<2x128xf32>
    %cst_55 = arith.constant 0.001953125 : f32
    %72 = vector.broadcast %cst_55 : f32 to vector<2x128xf32>
    %73 = arith.mulf %71, %72 : vector<2x128xf32>
    %74 = vector.extract_strided_slice %73 {offsets = [0, 0], sizes = [1, 128], strides = [1, 1]} : vector<2x128xf32> to vector<1x128xf32>
    %75 = vector.extract_strided_slice %73 {offsets = [1, 0], sizes = [1, 128], strides = [1, 1]} : vector<2x128xf32> to vector<1x128xf32>
    %76 = arith.mulf %74, %74 : vector<1x128xf32>
    %77 = arith.subf %75, %76 : vector<1x128xf32>
    %78 = vector.broadcast %74 : vector<1x128xf32> to vector<33x128xf32>
    %79 = arith.subf %63, %78 : vector<33x128xf32>
    %cst_56 = arith.constant 9.99999974E-6 : f32
    %80 = vector.broadcast %cst_56 : f32 to vector<1x128xf32>
    %81 = arith.addf %77, %80 : vector<1x128xf32>
    %82 = math.rsqrt %81 : vector<1x128xf32>
    %c0_57 = arith.constant 0 : index
    %c0_58 = arith.constant 0 : index
    %83 = vector.load %arg10[%c0_57, %c0_58] : memref<1x128xf32, #tpu.memory_space<vmem>>, vector<1x128xf32>
    %84 = arith.mulf %82, %83 : vector<1x128xf32>
    %85 = vector.broadcast %84 : vector<1x128xf32> to vector<33x128xf32>
    %86 = arith.mulf %79, %85 : vector<33x128xf32>
    %c0_59 = arith.constant 0 : index
    %c0_60 = arith.constant 0 : index
    %87 = vector.load %arg11[%c0_59, %c0_60] : memref<1x128xf32, #tpu.memory_space<vmem>>, vector<1x128xf32>
    %88 = vector.broadcast %87 : vector<1x128xf32> to vector<33x128xf32>
    %89 = arith.addf %86, %88 : vector<33x128xf32>
    %cst_61 = arith.constant 0.000000e+00 : f32
    %90 = vector.broadcast %cst_61 : f32 to vector<33x128xf32>
    %91 = arith.maximumf %89, %90 : vector<33x128xf32>
    %c0_62 = arith.constant 0 : index
    %c0_63 = arith.constant 0 : index
    %92 = vector.load %arg12[%c0_62, %c0_63] : memref<33x128xf32, #tpu.memory_space<vmem>>, vector<33x128xf32>
    tpu.vector_store %arg12[%c0_62, %c0_63], %91 {strides = array<i32>} : memref<33x128xf32, #tpu.memory_space<vmem>>, vector<33x128xf32>,
    return
  }
  func.func @transform_0(%arg0: i32) -> (i32, i32) {
    %c0_i32 = arith.constant 0 : i32
    %c0_i32_0 = arith.constant 0 : i32
    %c0_i32_1 = arith.constant 0 : i32
    return %c0_i32, %c0_i32_0 : i32, i32
  }
  func.func @transform_1(%arg0: i32) -> (i32, i32) {
    %c0_i32 = arith.constant 0 : i32
    %c0_i32_0 = arith.constant 0 : i32
    %c0_i32_1 = arith.constant 0 : i32
    return %c0_i32, %c0_i32_0 : i32, i32
  }
  func.func @transform_2(%arg0: i32) -> (i32, i32) {
    %c0_i32 = arith.constant 0 : i32
    %c0_i32_0 = arith.constant 0 : i32
    %c0_i32_1 = arith.constant 0 : i32
    return %c0_i32, %c0_i32_0 : i32, i32
  }
  func.func @transform_3(%arg0: i32) -> (i32, i32) {
    %c0_i32 = arith.constant 0 : i32
    %c0_i32_0 = arith.constant 0 : i32
    %c0_i32_1 = arith.constant 0 : i32
    return %c0_i32, %c0_i32_0 : i32, i32
  }
  func.func @transform_4(%arg0: i32) -> (i32, i32) {
    %c0_i32 = arith.constant 0 : i32
    %c0_i32_0 = arith.constant 0 : i32
    %c0_i32_1 = arith.constant 0 : i32
    return %c0_i32, %c0_i32_0 : i32, i32
  }
  func.func @transform_5(%arg0: i32) -> (i32, i32) {
    %c0_i32 = arith.constant 0 : i32
    %c0_i32_0 = arith.constant 0 : i32
    %c0_i32_1 = arith.constant 0 : i32
    return %c0_i32, %c0_i32_0 : i32, i32
  }
  func.func @transform_6(%arg0: i32) -> (i32, i32) {
    %c0_i32 = arith.constant 0 : i32
    %c0_i32_0 = arith.constant 0 : i32
    %c0_i32_1 = arith.constant 0 : i32
    return %c0_i32, %c0_i32_0 : i32, i32
  }
  func.func @transform_7(%arg0: i32) -> (i32, i32) {
    %c0_i32 = arith.constant 0 : i32
    %c0_i32_0 = arith.constant 0 : i32
    %c0_i32_1 = arith.constant 0 : i32
    return %c0_i32, %c0_i32_0 : i32, i32
  }
  func.func @transform_8(%arg0: i32) -> (i32, i32) {
    %c0_i32 = arith.constant 0 : i32
    %c0_i32_0 = arith.constant 0 : i32
    %c0_i32_1 = arith.constant 0 : i32
    return %c0_i32, %c0_i32_0 : i32, i32
  }
  func.func @transform_9(%arg0: i32) -> (i32, i32) {
    %c0_i32 = arith.constant 0 : i32
    %c0_i32_0 = arith.constant 0 : i32
    %c0_i32_1 = arith.constant 0 : i32
    return %c0_i32, %c0_i32_0 : i32, i32
  }
  func.func @transform_10(%arg0: i32) -> (i32, i32) {
    %c0_i32 = arith.constant 0 : i32
    %c0_i32_0 = arith.constant 0 : i32
    %c0_i32_1 = arith.constant 0 : i32
    return %c0_i32, %c0_i32_0 : i32, i32
  }
  func.func @transform_11(%arg0: i32) -> (i32, i32) {
    %c0_i32 = arith.constant 0 : i32
    %c0_i32_0 = arith.constant 0 : i32
    %c0_i32_1 = arith.constant 0 : i32
    return %c0_i32, %c0_i32_0 : i32, i32
  }
}

</mosaic_0001>

<llo_original>
// kernel: tpu_custom_call.1
$region0: #{tpu_custom_call.1}
  #allocation0 [shape = 'u32[]', space=smem, size = 0x4, offset = 0x4, fixed_abs, tag = 'smem constant byte address 0x4 - core index']
  #allocation1 [shape = 'u32[144,128]{1,0:T(1,128)}', space=vmem, size = 0x12000, scoped, tag = 'internal scratch']
  #allocation2 [shape = 'f32[35,128]{1,0:T(8,128)}', space=vmem, size = 0x5000, scoped, tag = 'scratch operand']
  %s0 = inlined_call_operand.vmem [shape: f32[35,64], index: 0, kind: input, shape index: {}]
  %s1 = inlined_call_operand.hbm [shape: f32[35,128], index: 1, kind: input, shape index: {}]
  %s2 = inlined_call_operand.hbm [shape: f32[192,128], index: 2, kind: input, shape index: {}]
  %s3 = inlined_call_operand.hbm [shape: f32[768,128], index: 3, kind: input, shape index: {}]
  %s4 = inlined_call_operand.hbm [shape: f32[384,128], index: 4, kind: input, shape index: {}]
  %s5 = inlined_call_operand.hbm [shape: f32[128,128], index: 5, kind: input, shape index: {}]
  %s6 = inlined_call_operand.vmem [shape: f32[33,1], index: 6, kind: input, shape index: {}]
  %s7 = inlined_call_operand.vmem [shape: f32[1,128], index: 7, kind: input, shape index: {}]
  %s8 = inlined_call_operand.vmem [shape: f32[1,128], index: 8, kind: input, shape index: {}]
  %s9 = inlined_call_operand.vmem [shape: f32[1,128], index: 9, kind: input, shape index: {}]
  %s10 = inlined_call_operand.vmem [shape: f32[1,128], index: 10, kind: input, shape index: {}]
  %s11 = inlined_call_operand.hbm [shape: f32[33,128], index: 11, kind: output, shape index: {}]
  %s12 = sld [smem:[#allocation0]]
  $region74: #{tpu_custom_call.1} parent=0
    _
  %s14 = ssub.s32 1, %s12
  %s15 = scalar_select 0, %s14, %s12
  $region1: #{tpu_custom_call.1} parent=0
    #allocation3 [shape = 'u8[20480]{0}', space=vmem, size = 0x5000, scoped, tag = 'input window, operand 1, single buffered']
    #allocation4 [shape = 's32[1]{0}', space=sflag, size = 0x4, scoped, tag = 'scoped memory for tpu_custom_call.1']
    #allocation5 [shape = 's32[1]{0}', space=sflag, size = 0x4, scoped, tag = 'scoped memory for tpu_custom_call.1']
    #allocation6 [shape = 'u8[98304]{0}', space=vmem, size = 0x18000, scoped, tag = 'input window, operand 2, single buffered']
    #allocation7 [shape = 's32[1]{0}', space=sflag, size = 0x4, scoped, tag = 'scoped memory for tpu_custom_call.1']
    #allocation8 [shape = 'u8[393216]{0}', space=vmem, size = 0x60000, scoped, tag = 'input window, operand 3, single buffered']
    #allocation9 [shape = 'u8[196608]{0}', space=vmem, size = 0x30000, scoped, tag = 'input window, operand 4, single buffered']
    #allocation10 [shape = 's32[1]{0}', space=sflag, size = 0x4, scoped, tag = 'scoped memory for tpu_custom_call.1']
    #allocation11 [shape = 'u8[65536]{0}', space=vmem, size = 0x10000, scoped, tag = 'input window, operand 5, single buffered']
    #allocation12 [shape = 'u8[20480]{0}', space=vmem, size = 0x5000, scoped, tag = 'output window, operand 0, single buffered']
    %16 = vsyncpa [#allocation4], 0
    %17 = vsyncpa [#allocation7], 0
    %18 = vsyncpa [#allocation10], 0
    %19 = vsyncpa [#allocation5], 0
    // Predicated region
    $region2: #{tpu_custom_call.1} parent=1 // pred_check
      _
    $region3: #{tpu_custom_call.1} parent=1 // pred_check_branch
      %21 = sbr.rel (0) target = $region5
    $region4: #{tpu_custom_call.1} parent=1 // pred_region
      _
    $region5: #{tpu_custom_call.1} parent=1 // pred_fallthru
      _
    // Predicated region
    $region6: #{tpu_custom_call.1} parent=1 // pred_check
      _
    $region7: #{tpu_custom_call.1} parent=1 // pred_check_branch
      %23 = sbr.rel (0) target = $region9
    $region8: #{tpu_custom_call.1} parent=1 // pred_region
      %s25 = ssub.s32 640, 640
      %26 = vsyncadd [#allocation4], %s25
      %s27 = sshll.u32 [#allocation3], 4
      %s28 = int_to_ptr.vmem [resolvable:$true] %s27
      %33 = dma.hbm_to_vmem [thread:$0]  %s1, 640, %s28, [#allocation4], 128, 128, 8
    $region9: #{tpu_custom_call.1} parent=1 // pred_fallthru
      _
    // Predicated region
    $region10: #{tpu_custom_call.1} parent=1 // pred_check
      _
    $region11: #{tpu_custom_call.1} parent=1 // pred_check_branch
      %35 = sbr.rel (0) target = $region13
    $region12: #{tpu_custom_call.1} parent=1 // pred_region
      %s37 = ssub.s32 3072, 3072
      %38 = vsyncadd [#allocation7], %s37
      %s39 = sshll.u32 [#allocation6], 4
      %s40 = int_to_ptr.vmem [resolvable:$true] %s39
      %45 = dma.hbm_to_vmem [thread:$0]  %s2, 3072, %s40, [#allocation7], 128, 128, 8
    $region13: #{tpu_custom_call.1} parent=1 // pred_fallthru
      _
    // Predicated region
    $region14: #{tpu_custom_call.1} parent=1 // pred_check
      _
    $region15: #{tpu_custom_call.1} parent=1 // pred_check_branch
      %47 = sbr.rel (0) target = $region17
    $region16: #{tpu_custom_call.1} parent=1 // pred_region
      %s49 = ssub.s32 12288, 12288
      %50 = vsyncadd [#allocation7], %s49
      %s51 = sshll.u32 [#allocation8], 4
      %s52 = int_to_ptr.vmem [resolvable:$true] %s51
      %57 = dma.hbm_to_vmem [thread:$0]  %s3, 12288, %s52, [#allocation7], 128, 128, 8
    $region17: #{tpu_custom_call.1} parent=1 // pred_fallthru
      _
    // Predicated region
    $region18: #{tpu_custom_call.1} parent=1 // pred_check
      _
    $region19: #{tpu_custom_call.1} parent=1 // pred_check_branch
      %59 = sbr.rel (0) target = $region21
    $region20: #{tpu_custom_call.1} parent=1 // pred_region
      %s61 = ssub.s32 6144, 6144
      %62 = vsyncadd [#allocation10], %s61
      %s63 = sshll.u32 [#allocation9], 4
      %s64 = int_to_ptr.vmem [resolvable:$true] %s63
      %69 = dma.hbm_to_vmem [thread:$0]  %s4, 6144, %s64, [#allocation10], 128, 128, 8
    $region21: #{tpu_custom_call.1} parent=1 // pred_fallthru
      _
    // Predicated region
    $region22: #{tpu_custom_call.1} parent=1 // pred_check
      _
    $region23: #{tpu_custom_call.1} parent=1 // pred_check_branch
      %71 = sbr.rel (0) target = $region25
    $region24: #{tpu_custom_call.1} parent=1 // pred_region
      %s73 = ssub.s32 2048, 2048
      %74 = vsyncadd [#allocation10], %s73
      %s75 = sshll.u32 [#allocation11], 4
      %s76 = int_to_ptr.vmem [resolvable:$true] %s75
      %81 = dma.hbm_to_vmem [thread:$0]  %s5, 2048, %s76, [#allocation10], 128, 128, 8
    $region25: #{tpu_custom_call.1} parent=1 // pred_fallthru
      _
    // Predicated region
    $region26: #{tpu_custom_call.1} parent=1 // pred_check
      _
    $region27: #{tpu_custom_call.1} parent=1 // pred_check_branch
      %83 = sbr.rel (0) target = $region29
    $region28: #{tpu_custom_call.1} parent=1 // pred_region
      _
    $region29: #{tpu_custom_call.1} parent=1 // pred_fallthru
      _
    // Predicated region
    $region30: #{tpu_custom_call.1} parent=1 // pred_check
      _
    $region31: #{tpu_custom_call.1} parent=1 // pred_check_branch
      %85 = sbr.rel (0) target = $region33
    $region32: #{tpu_custom_call.1} parent=1 // pred_region
      _
    $region33: #{tpu_custom_call.1} parent=1 // pred_fallthru
      _
    // Predicated region
    $region34: #{tpu_custom_call.1} parent=1 // pred_check
      _
    $region35: #{tpu_custom_call.1} parent=1 // pred_check_branch
      %87 = sbr.rel (0) target = $region37
    $region36: #{tpu_custom_call.1} parent=1 // pred_region
      _
    $region37: #{tpu_custom_call.1} parent=1 // pred_fallthru
      _
    // Predicated region
    $region38: #{tpu_custom_call.1} parent=1 // pred_check
      _
    $region39: #{tpu_custom_call.1} parent=1 // pred_check_branch
      %89 = sbr.rel (0) target = $region41
    $region40: #{tpu_custom_call.1} parent=1 // pred_region
      _
    $region41: #{tpu_custom_call.1} parent=1 // pred_fallthru
      _
    // Predicated region
    $region42: #{tpu_custom_call.1} parent=1 // pred_check
      _
    $region43: #{tpu_custom_call.1} parent=1 // pred_check_branch
      %91 = sbr.rel (0) target = $region45
    $region44: #{tpu_custom_call.1} parent=1 // pred_region
      _
    $region45: #{tpu_custom_call.1} parent=1 // pred_fallthru
      _
    // Predicated region
    $region46: #{tpu_custom_call.1} parent=1 // pred_check
      _
    $region47: #{tpu_custom_call.1} parent=1 // pred_check_branch
      %93 = sbr.rel (0) target = $region49
    $region48: #{tpu_custom_call.1} parent=1 // pred_region
      %94 = dma.done [#allocation4], 640
    $region49: #{tpu_custom_call.1} parent=1 // pred_fallthru
      _
    // Predicated region
    $region50: #{tpu_custom_call.1} parent=1 // pred_check
      _
    $region51: #{tpu_custom_call.1} parent=1 // pred_check_branch
      %96 = sbr.rel (0) target = $region53
    $region52: #{tpu_custom_call.1} parent=1 // pred_region
      %97 = dma.done [#allocation7], 3072
    $region53: #{tpu_custom_call.1} parent=1 // pred_fallthru
      _
    // Predicated region
    $region54: #{tpu_custom_call.1} parent=1 // pred_check
      _
    $region55: #{tpu_custom_call.1} parent=1 // pred_check_branch
      %99 = sbr.rel (0) target = $region57
    $region56: #{tpu_custom_call.1} parent=1 // pred_region
      %100 = dma.done [#allocation7], 12288
    $region57: #{tpu_custom_call.1} parent=1 // pred_fallthru
      _
    // Predicated region
    $region58: #{tpu_custom_call.1} parent=1 // pred_check
      _
    $region59: #{tpu_custom_call.1} parent=1 // pred_check_branch
      %102 = sbr.rel (0) target = $region61
    $region60: #{tpu_custom_call.1} parent=1 // pred_region
      %103 = dma.done [#allocation10], 6144
    $region61: #{tpu_custom_call.1} parent=1 // pred_fallthru
      _
    // Predicated region
    $region62: #{tpu_custom_call.1} parent=1 // pred_check
      _
    $region63: #{tpu_custom_call.1} parent=1 // pred_check_branch
      %105 = sbr.rel (0) target = $region65
    $region64: #{tpu_custom_call.1} parent=1 // pred_region
      %106 = dma.done [#allocation10], 2048
    $region65: #{tpu_custom_call.1} parent=1 // pred_fallthru
      _
    %v107 = vld [vmem:[%s6] sm:$0xff]
    %v108 = vld [vmem:[%s6 + $0x8] sm:$0xff]
    %v109 = vld [vmem:[%s6 + $0x10] sm:$0xff]
    %v110 = vld [vmem:[%s6 + $0x18] sm:$0xff]
    %v111 = vld [vmem:[%s6 + $0x20] sm:$0x1]
    %v112 = vld [vmem:[%s0] sm:$0xff]
    %v113 = vld [vmem:[%s0 + $0x8] sm:$0xff]
    %v114 = vld [vmem:[%s0 + $0x10] sm:$0xff]
    %v115 = vld [vmem:[%s0 + $0x18] sm:$0xff]
    %v116 = vld [vmem:[%s0 + $0x20] sm:$0x1]
    %v117 = vld [vmem:[%s0 + $0x1] sm:$0xff]
    %v118 = vld [vmem:[%s0 + $0x9] sm:$0xff]
    %v119 = vld [vmem:[%s0 + $0x11] sm:$0xff]
    %v120 = vld [vmem:[%s0 + $0x19] sm:$0xff]
    %v121 = vld [vmem:[%s0 + $0x21] sm:$0x1]
    %v122 = vld [vmem:[%s0 + $0x2] sm:$0xff]
    %v123 = vld [vmem:[%s0 + $0xa] sm:$0xff]
    %v124 = vld [vmem:[%s0 + $0x12] sm:$0xff]
    %v125 = vld [vmem:[%s0 + $0x1a] sm:$0xff]
    %v126 = vld [vmem:[%s0 + $0x22] sm:$0x1]
    %132 = vrot.lane.b32.xlu0 %v117, 64
    %v133 = vpop.permute.xlu0 %132
    %134 = vrot.lane.b32.xlu0 %v118, 64
    %v135 = vpop.permute.xlu0 %134
    %136 = vrot.lane.b32.xlu0 %v119, 64
    %v137 = vpop.permute.xlu0 %136
    %138 = vrot.lane.b32.xlu0 %v120, 64
    %v139 = vpop.permute.xlu0 %138
    %140 = vrot.lane.b32.xlu0 %v121, 64
    %v141 = vpop.permute.xlu0 %140
    %vm147 = vcmask 523264
    %v148 = vsel %vm147, %v112, %v133
    %v149 = vsel %vm147, %v113, %v135
    %v150 = vsel %vm147, %v114, %v137
    %v151 = vsel %vm147, %v115, %v139
    %v152 = vsel %vm147, %v116, %v141
    %v153 = vld [vmem:[#allocation6] sm:$0xff]
    %v154 = vld [vmem:[#allocation6 + $0x8] sm:$0xff]
    %v155 = vld [vmem:[#allocation6 + $0x10] sm:$0xff]
    %v156 = vld [vmem:[#allocation6 + $0x18] sm:$0xff]
    %v157 = vld [vmem:[#allocation6 + $0x20] sm:$0xff]
    %v158 = vld [vmem:[#allocation6 + $0x28] sm:$0xff]
    %v159 = vld [vmem:[#allocation6 + $0x30] sm:$0xff]
    %v160 = vld [vmem:[#allocation6 + $0x38] sm:$0xff]
    %v161 = vld [vmem:[#allocation6 + $0x40] sm:$0xff]
    %v162 = vld [vmem:[#allocation6 + $0x48] sm:$0xff]
    %v163 = vld [vmem:[#allocation6 + $0x50] sm:$0xff]
    %v164 = vld [vmem:[#allocation6 + $0x58] sm:$0xff]
    %v165 = vld [vmem:[#allocation6 + $0x60] sm:$0xff]
    %v166 = vld [vmem:[#allocation6 + $0x68] sm:$0xff]
    %v167 = vld [vmem:[#allocation6 + $0x70] sm:$0xff]
    %v168 = vld [vmem:[#allocation6 + $0x78] sm:$0xff]
    %v169 = vld [vmem:[#allocation6 + $0x80] sm:$0xff]
    %v170 = vld [vmem:[#allocation6 + $0x88] sm:$0xff]
    %v171 = vld [vmem:[#allocation6 + $0x90] sm:$0xff]
    %v172 = vld [vmem:[#allocation6 + $0x98] sm:$0xff]
    %v173 = vld [vmem:[#allocation6 + $0xa0] sm:$0xff]
    %v174 = vld [vmem:[#allocation6 + $0xa8] sm:$0xff]
    %v175 = vld [vmem:[#allocation6 + $0xb0] sm:$0xff]
    %v176 = vld [vmem:[#allocation6 + $0xb8] sm:$0xff]
    %v178 = vsel %vm147, %v122, 0
    %v181 = vsel %vm147, %v123, 0
    %v184 = vsel %vm147, %v124, 0
    %v187 = vsel %vm147, %v125, 0
    %v190 = vsel %vm147, %v126, 0
    %192 = vmatprep.subr.mxu0 0.0
    %193 = vmatpush1.msra.mxu0 %v153
    %194 = vmatprep.subr.mxu0 0.0
    %195 = vmatpush1.msra.mxu0 %v154
    %196 = vmatprep.subr.mxu0 0.0
    %197 = vmatpush1.msra.mxu0 %v155
    %198 = vmatprep.subr.mxu0 0.0
    %199 = vmatpush1.msra.mxu0 %v156
    %200 = vmatprep.subr.mxu0 0.0
    %201 = vmatpush1.msra.mxu0 %v157
    %202 = vmatprep.subr.mxu0 0.0
    %203 = vmatpush1.msra.mxu0 %v158
    %204 = vmatprep.subr.mxu0 0.0
    %205 = vmatpush1.msra.mxu0 %v159
    %206 = vmatprep.subr.mxu0 0.0
    %207 = vmatpush1.msra.mxu0 %v160
    %208 = vmatprep.subr.mxu0 0.0
    %209 = vmatpush1.msra.mxu0 %v161
    %210 = vmatprep.subr.mxu0 0.0
    %211 = vmatpush1.msra.mxu0 %v162
    %212 = vmatprep.subr.mxu0 0.0
    %213 = vmatpush1.msra.mxu0 %v163
    %214 = vmatprep.subr.mxu0 0.0
    %215 = vmatpush1.msra.mxu0 %v164
    %216 = vmatprep.subr.mxu0 0.0
    %217 = vmatpush1.msra.mxu0 %v165
    %218 = vmatprep.subr.mxu0 0.0
    %219 = vmatpush1.msra.mxu0 %v166
    %220 = vmatprep.subr.mxu0 0.0
    %221 = vmatpush1.msra.mxu0 %v167
    %222 = vmatprep.subr.mxu0 0.0
    %223 = vmatpush1.msra.mxu0 %v168
    %224 = vmatprep.subr.mxu0 0.0
    %225 = vmatpush1.msra.mxu0 %v169
    %226 = vmatprep.subr.mxu0 0.0
    %227 = vmatpush1.msra.mxu0 %v170
    %228 = vmatprep.subr.mxu0 0.0
    %229 = vmatpush1.msra.mxu0 %v171
    %230 = vmatprep.subr.mxu0 0.0
    %231 = vmatpush1.msra.mxu0 %v172
    %232 = vmatprep.subr.mxu0 0.0
    %233 = vmatpush1.msra.mxu0 %v173
    %234 = vmatprep.subr.mxu0 0.0
    %235 = vmatpush1.msra.mxu0 %v174
    %236 = vmatprep.subr.mxu0 0.0
    %237 = vmatpush1.msra.mxu0 %v175
    %238 = vmatprep.subr.mxu0 0.0
    %239 = vmatpush1.msra.mxu0 %v176
    %240 = vmatprep.subr.mxu0 0.0
    %241 = vmatpush1.msra.mxu0 0.0
    %242 = vmatprep.subr.mxu0 0.0
    %243 = vmatpush1.msra.mxu0 0.0
    %244 = vmatprep.subr.mxu0 0.0
    %245 = vmatpush1.msra.mxu0 0.0
    %246 = vmatprep.subr.mxu0 0.0
    %247 = vmatpush1.msra.mxu0 0.0
    %248 = vmatprep.subr.mxu0 0.0
    %249 = vmatpush1.msra.mxu0 0.0
    %250 = vmatprep.subr.mxu0 0.0
    %251 = vmatpush1.msra.mxu0 0.0
    %252 = vmatprep.subr.mxu0 0.0
    %253 = vmatpush1.msra.mxu0 0.0
    %254 = vmatprep.subr.mxu0 0.0
    %255 = vmatpush1.msra.mxu0 0.0
    %256 = vmatprep.mubr.f32.mxu0 %v178
    %257 = vmatmul.mubr.f32.gmra.mrb[0].mxu0 %v148
    %v258 = vpop.f32.mrb[0].mxu0
    %v259 = vadd.f32 0.0, %v258
    %v260 = vpop.f32.mrb[0].mxu0
    %261 = vmatprep.mubr.f32.mxu0 %v181
    %262 = vmatmul.mubr.f32.gmra.mrb[0].mxu0 %v149
    %v263 = vpop.f32.mrb[0].mxu0
    %v264 = vadd.f32 0.0, %v263
    %v265 = vpop.f32.mrb[0].mxu0
    %266 = vmatprep.mubr.f32.mxu0 %v184
    %267 = vmatmul.mubr.f32.gmra.mrb[0].mxu0 %v150
    %v268 = vpop.f32.mrb[0].mxu0
    %v269 = vadd.f32 0.0, %v268
    %v270 = vpop.f32.mrb[0].mxu0
    %271 = vmatprep.mubr.f32.mxu0 %v187
    %272 = vmatmul.mubr.f32.gmra.mrb[0].mxu0 %v151
    %v273 = vpop.f32.mrb[0].mxu0
    %v274 = vadd.f32 0.0, %v273
    %v275 = vpop.f32.mrb[0].mxu0
    %276 = vmatprep.mubr.f32.mxu0 %v190
    %277 = vmatmul.mubr.f32.gmra.mrb[0].mxu0 %v152
    %v278 = vpop.f32.mrb[0].mxu0
    %v279 = vadd.f32 0.0, %v278
    %v280 = vpop.f32.mrb[0].mxu0
    %281 = vdwg.mxu0
    %283 = vset.pattern.permute.xlu0 0
    %284 = vperm.xlu0 %283, %v107
    %v285 = vpop.permute.xlu0 %284
    %288 = vset.pattern.permute.xlu0 0
    %289 = vperm.xlu0 %288, %v108
    %v290 = vpop.permute.xlu0 %289
    %293 = vset.pattern.permute.xlu0 0
    %294 = vperm.xlu0 %293, %v109
    %v295 = vpop.permute.xlu0 %294
    %298 = vset.pattern.permute.xlu0 0
    %299 = vperm.xlu0 %298, %v110
    %v300 = vpop.permute.xlu0 %299
    %303 = vset.pattern.permute.xlu0 0
    %304 = vperm.xlu0 %303, %v111
    %v305 = vpop.permute.xlu0 %304
    %v307 = vmul.f32 %v259, %v285
    %v308 = vmul.f32 %v264, %v290
    %v309 = vmul.f32 %v269, %v295
    %v310 = vmul.f32 %v274, %v300
    %v311 = vmul.f32 %v279, %v305
    %312 = vst [vmem:[#allocation2] sm:$0xff] 0.0
    %313 = vst [vmem:[#allocation2 + $0x8] sm:$0xff] 0.0
    %314 = vst [vmem:[#allocation2 + $0x10] sm:$0xff] 0.0
    %315 = vst [vmem:[#allocation2 + $0x18] sm:$0xff] 0.0
    %316 = vst [vmem:[#allocation2 + $0x20] sm:$0x7] 0.0
    %317 = vst [vmem:[#allocation2 + $0x1] sm:$0xff] %v307
    %318 = vst [vmem:[#allocation2 + $0x9] sm:$0xff] %v308
    %319 = vst [vmem:[#allocation2 + $0x11] sm:$0xff] %v309
    %320 = vst [vmem:[#allocation2 + $0x19] sm:$0xff] %v310
    %321 = vst [vmem:[#allocation2 + $0x21] sm:$0x1] %v311
    %v322 = vld [vmem:[#allocation2] sm:$0xff]
    %v323 = vld [vmem:[#allocation2 + $0x8] sm:$0xff]
    %v324 = vld [vmem:[#allocation2 + $0x10] sm:$0xff]
    %v325 = vld [vmem:[#allocation2 + $0x18] sm:$0xff]
    %v326 = vld [vmem:[#allocation2 + $0x20] sm:$0x1]
    %v327 = vld [vmem:[#allocation2 + $0x1] sm:$0xff]
    %v328 = vld [vmem:[#allocation2 + $0x9] sm:$0xff]
    %v329 = vld [vmem:[#allocation2 + $0x11] sm:$0xff]
    %v330 = vld [vmem:[#allocation2 + $0x19] sm:$0xff]
    %v331 = vld [vmem:[#allocation2 + $0x21] sm:$0x1]
    %v332 = vld [vmem:[#allocation2 + $0x2] sm:$0xff]
    %v333 = vld [vmem:[#allocation2 + $0xa] sm:$0xff]
    %v334 = vld [vmem:[#allocation2 + $0x12] sm:$0xff]
    %v335 = vld [vmem:[#allocation2 + $0x1a] sm:$0xff]
    %v336 = vld [vmem:[#allocation2 + $0x22] sm:$0x1]
    %v337 = vld [vmem:[#allocation3] sm:$0xff]
    %v338 = vld [vmem:[#allocation3 + $0x8] sm:$0xff]
    %v339 = vld [vmem:[#allocation3 + $0x10] sm:$0xff]
    %v340 = vld [vmem:[#allocation3 + $0x18] sm:$0xff]
    %v341 = vld [vmem:[#allocation3 + $0x20] sm:$0x1]
    %v342 = vld [vmem:[#allocation3 + $0x1] sm:$0xff]
    %v343 = vld [vmem:[#allocation3 + $0x9] sm:$0xff]
    %v344 = vld [vmem:[#allocation3 + $0x11] sm:$0xff]
    %v345 = vld [vmem:[#allocation3 + $0x19] sm:$0xff]
    %v346 = vld [vmem:[#allocation3 + $0x21] sm:$0x1]
    %v347 = vld [vmem:[#allocation3 + $0x2] sm:$0xff]
    %v348 = vld [vmem:[#allocation3 + $0xa] sm:$0xff]
    %v349 = vld [vmem:[#allocation3 + $0x12] sm:$0xff]
    %v350 = vld [vmem:[#allocation3 + $0x1a] sm:$0xff]
    %v351 = vld [vmem:[#allocation3 + $0x22] sm:$0x1]
    %v352 = vld [vmem:[#allocation8] sm:$0xff]
    %v353 = vld [vmem:[#allocation8 + $0x8] sm:$0xff]
    %v354 = vld [vmem:[#allocation8 + $0x10] sm:$0xff]
    %v355 = vld [vmem:[#allocation8 + $0x18] sm:$0xff]
    %v356 = vld [vmem:[#allocation8 + $0x20] sm:$0xff]
    %v357 = vld [vmem:[#allocation8 + $0x28] sm:$0xff]
    %v358 = vld [vmem:[#allocation8 + $0x30] sm:$0xff]
    %v359 = vld [vmem:[#allocation8 + $0x38] sm:$0xff]
    %v360 = vld [vmem:[#allocation8 + $0x40] sm:$0xff]
    %v361 = vld [vmem:[#allocation8 + $0x48] sm:$0xff]
    %v362 = vld [vmem:[#allocation8 + $0x50] sm:$0xff]
    %v363 = vld [vmem:[#allocation8 + $0x58] sm:$0xff]
    %v364 = vld [vmem:[#allocation8 + $0x60] sm:$0xff]
    %v365 = vld [vmem:[#allocation8 + $0x68] sm:$0xff]
    %v366 = vld [vmem:[#allocation8 + $0x70] sm:$0xff]
    %v367 = vld [vmem:[#allocation8 + $0x78] sm:$0xff]
    %v368 = vld [vmem:[#allocation8 + $0x80] sm:$0xff]
    %v369 = vld [vmem:[#allocation8 + $0x88] sm:$0xff]
    %v370 = vld [vmem:[#allocation8 + $0x90] sm:$0xff]
    %v371 = vld [vmem:[#allocation8 + $0x98] sm:$0xff]
    %v372 = vld [vmem:[#allocation8 + $0xa0] sm:$0xff]
    %v373 = vld [vmem:[#allocation8 + $0xa8] sm:$0xff]
    %v374 = vld [vmem:[#allocation8 + $0xb0] sm:$0xff]
    %v375 = vld [vmem:[#allocation8 + $0xb8] sm:$0xff]
    %v376 = vld [vmem:[#allocation8 + $0xc0] sm:$0xff]
    %v377 = vld [vmem:[#allocation8 + $0xc8] sm:$0xff]
    %v378 = vld [vmem:[#allocation8 + $0xd0] sm:$0xff]
    %v379 = vld [vmem:[#allocation8 + $0xd8] sm:$0xff]
    %v380 = vld [vmem:[#allocation8 + $0xe0] sm:$0xff]
    %v381 = vld [vmem:[#allocation8 + $0xe8] sm:$0xff]
    %v382 = vld [vmem:[#allocation8 + $0xf0] sm:$0xff]
    %v383 = vld [vmem:[#allocation8 + $0xf8] sm:$0xff]
    %v384 = vld [vmem:[#allocation8 + $0x100] sm:$0xff]
    %v385 = vld [vmem:[#allocation8 + $0x108] sm:$0xff]
    %v386 = vld [vmem:[#allocation8 + $0x110] sm:$0xff]
    %v387 = vld [vmem:[#allocation8 + $0x118] sm:$0xff]
    %v388 = vld [vmem:[#allocation8 + $0x120] sm:$0xff]
    %v389 = vld [vmem:[#allocation8 + $0x128] sm:$0xff]
    %v390 = vld [vmem:[#allocation8 + $0x130] sm:$0xff]
    %v391 = vld [vmem:[#allocation8 + $0x138] sm:$0xff]
    %v392 = vld [vmem:[#allocation8 + $0x140] sm:$0xff]
    %v393 = vld [vmem:[#allocation8 + $0x148] sm:$0xff]
    %v394 = vld [vmem:[#allocation8 + $0x150] sm:$0xff]
    %v395 = vld [vmem:[#allocation8 + $0x158] sm:$0xff]
    %v396 = vld [vmem:[#allocation8 + $0x160] sm:$0xff]
    %v397 = vld [vmem:[#allocation8 + $0x168] sm:$0xff]
    %v398 = vld [vmem:[#allocation8 + $0x170] sm:$0xff]
    %v399 = vld [vmem:[#allocation8 + $0x178] sm:$0xff]
    %v400 = vld [vmem:[#allocation8 + $0x180] sm:$0xff]
    %v401 = vld [vmem:[#allocation8 + $0x188] sm:$0xff]
    %v402 = vld [vmem:[#allocation8 + $0x190] sm:$0xff]
    %v403 = vld [vmem:[#allocation8 + $0x198] sm:$0xff]
    %v404 = vld [vmem:[#allocation8 + $0x1a0] sm:$0xff]
    %v405 = vld [vmem:[#allocation8 + $0x1a8] sm:$0xff]
    %v406 = vld [vmem:[#allocation8 + $0x1b0] sm:$0xff]
    %v407 = vld [vmem:[#allocation8 + $0x1b8] sm:$0xff]
    %v408 = vld [vmem:[#allocation8 + $0x1c0] sm:$0xff]
    %v409 = vld [vmem:[#allocation8 + $0x1c8] sm:$0xff]
    %v410 = vld [vmem:[#allocation8 + $0x1d0] sm:$0xff]
    %v411 = vld [vmem:[#allocation8 + $0x1d8] sm:$0xff]
    %v412 = vld [vmem:[#allocation8 + $0x1e0] sm:$0xff]
    %v413 = vld [vmem:[#allocation8 + $0x1e8] sm:$0xff]
    %v414 = vld [vmem:[#allocation8 + $0x1f0] sm:$0xff]
    %v415 = vld [vmem:[#allocation8 + $0x1f8] sm:$0xff]
    %v416 = vld [vmem:[#allocation8 + $0x200] sm:$0xff]
    %v417 = vld [vmem:[#allocation8 + $0x208] sm:$0xff]
    %v418 = vld [vmem:[#allocation8 + $0x210] sm:$0xff]
    %v419 = vld [vmem:[#allocation8 + $0x218] sm:$0xff]
    %v420 = vld [vmem:[#allocation8 + $0x220] sm:$0xff]
    %v421 = vld [vmem:[#allocation8 + $0x228] sm:$0xff]
    %v422 = vld [vmem:[#allocation8 + $0x230] sm:$0xff]
    %v423 = vld [vmem:[#allocation8 + $0x238] sm:$0xff]
    %v424 = vld [vmem:[#allocation8 + $0x240] sm:$0xff]
    %v425 = vld [vmem:[#allocation8 + $0x248] sm:$0xff]
    %v426 = vld [vmem:[#allocation8 + $0x250] sm:$0xff]
    %v427 = vld [vmem:[#allocation8 + $0x258] sm:$0xff]
    %v428 = vld [vmem:[#allocation8 + $0x260] sm:$0xff]
    %v429 = vld [vmem:[#allocation8 + $0x268] sm:$0xff]
    %v430 = vld [vmem:[#allocation8 + $0x270] sm:$0xff]
    %v431 = vld [vmem:[#allocation8 + $0x278] sm:$0xff]
    %v432 = vld [vmem:[#allocation8 + $0x280] sm:$0xff]
    %v433 = vld [vmem:[#allocation8 + $0x288] sm:$0xff]
    %v434 = vld [vmem:[#allocation8 + $0x290] sm:$0xff]
    %v435 = vld [vmem:[#allocation8 + $0x298] sm:$0xff]
    %v436 = vld [vmem:[#allocation8 + $0x2a0] sm:$0xff]
    %v437 = vld [vmem:[#allocation8 + $0x2a8] sm:$0xff]
    %v438 = vld [vmem:[#allocation8 + $0x2b0] sm:$0xff]
    %v439 = vld [vmem:[#allocation8 + $0x2b8] sm:$0xff]
    %v440 = vld [vmem:[#allocation8 + $0x2c0] sm:$0xff]
    %v441 = vld [vmem:[#allocation8 + $0x2c8] sm:$0xff]
    %v442 = vld [vmem:[#allocation8 + $0x2d0] sm:$0xff]
    %v443 = vld [vmem:[#allocation8 + $0x2d8] sm:$0xff]
    %v444 = vld [vmem:[#allocation8 + $0x2e0] sm:$0xff]
    %v445 = vld [vmem:[#allocation8 + $0x2e8] sm:$0xff]
    %v446 = vld [vmem:[#allocation8 + $0x2f0] sm:$0xff]
    %v447 = vld [vmem:[#allocation8 + $0x2f8] sm:$0xff]
    %448 = vmatprep.subr.mxu0 0.0
    %449 = vmatpush1.msra.mxu0 %v352
    %450 = vmatprep.subr.mxu0 0.0
    %451 = vmatpush1.msra.mxu0 %v353
    %452 = vmatprep.subr.mxu0 0.0
    %453 = vmatpush1.msra.mxu0 %v354
    %454 = vmatprep.subr.mxu0 0.0
    %455 = vmatpush1.msra.mxu0 %v355
    %456 = vmatprep.subr.mxu0 0.0
    %457 = vmatpush1.msra.mxu0 %v356
    %458 = vmatprep.subr.mxu0 0.0
    %459 = vmatpush1.msra.mxu0 %v357
    %460 = vmatprep.subr.mxu0 0.0
    %461 = vmatpush1.msra.mxu0 %v358
    %462 = vmatprep.subr.mxu0 0.0
    %463 = vmatpush1.msra.mxu0 %v359
    %464 = vmatprep.subr.mxu0 0.0
    %465 = vmatpush1.msra.mxu0 %v360
    %466 = vmatprep.subr.mxu0 0.0
    %467 = vmatpush1.msra.mxu0 %v361
    %468 = vmatprep.subr.mxu0 0.0
    %469 = vmatpush1.msra.mxu0 %v362
    %470 = vmatprep.subr.mxu0 0.0
    %471 = vmatpush1.msra.mxu0 %v363
    %472 = vmatprep.subr.mxu0 0.0
    %473 = vmatpush1.msra.mxu0 %v364
    %474 = vmatprep.subr.mxu0 0.0
    %475 = vmatpush1.msra.mxu0 %v365
    %476 = vmatprep.subr.mxu0 0.0
    %477 = vmatpush1.msra.mxu0 %v366
    %478 = vmatprep.subr.mxu0 0.0
    %479 = vmatpush1.msra.mxu0 %v367
    %480 = vmatprep.subr.mxu0 0.0
    %481 = vmatpush1.msra.mxu0 %v368
    %482 = vmatprep.subr.mxu0 0.0
    %483 = vmatpush1.msra.mxu0 %v369
    %484 = vmatprep.subr.mxu0 0.0
    %485 = vmatpush1.msra.mxu0 %v370
    %486 = vmatprep.subr.mxu0 0.0
    %487 = vmatpush1.msra.mxu0 %v371
    %488 = vmatprep.subr.mxu0 0.0
    %489 = vmatpush1.msra.mxu0 %v372
    %490 = vmatprep.subr.mxu0 0.0
    %491 = vmatpush1.msra.mxu0 %v373
    %492 = vmatprep.subr.mxu0 0.0
    %493 = vmatpush1.msra.mxu0 %v374
    %494 = vmatprep.subr.mxu0 0.0
    %495 = vmatpush1.msra.mxu0 %v375
    %496 = vmatprep.subr.mxu0 0.0
    %497 = vmatpush1.msra.mxu0 %v376
    %498 = vmatprep.subr.mxu0 0.0
    %499 = vmatpush1.msra.mxu0 %v377
    %500 = vmatprep.subr.mxu0 0.0
    %501 = vmatpush1.msra.mxu0 %v378
    %502 = vmatprep.subr.mxu0 0.0
    %503 = vmatpush1.msra.mxu0 %v379
    %504 = vmatprep.subr.mxu0 0.0
    %505 = vmatpush1.msra.mxu0 %v380
    %506 = vmatprep.subr.mxu0 0.0
    %507 = vmatpush1.msra.mxu0 %v381
    %508 = vmatprep.subr.mxu0 0.0
    %509 = vmatpush1.msra.mxu0 %v382
    %510 = vmatprep.subr.mxu0 0.0
    %511 = vmatpush1.msra.mxu0 %v383
    %512 = vmatprep.mubr.f32.mxu0 %v327
    %513 = vmatmul.mubr.f32.gmra.mrb[0].mxu0 %v322
    %v514 = vpop.f32.mrb[0].mxu0
    %v515 = vadd.f32 0.0, %v514
    %v516 = vpop.f32.mrb[0].mxu0
    %517 = vmatprep.mubr.f32.mxu0 %v328
    %518 = vmatmul.mubr.f32.gmra.mrb[0].mxu0 %v323
    %v519 = vpop.f32.mrb[0].mxu0
    %v520 = vadd.f32 0.0, %v519
    %v521 = vpop.f32.mrb[0].mxu0
    %522 = vmatprep.mubr.f32.mxu0 %v329
    %523 = vmatmul.mubr.f32.gmra.mrb[0].mxu0 %v324
    %v524 = vpop.f32.mrb[0].mxu0
    %v525 = vadd.f32 0.0, %v524
    %v526 = vpop.f32.mrb[0].mxu0
    %527 = vmatprep.mubr.f32.mxu0 %v330
    %528 = vmatmul.mubr.f32.gmra.mrb[0].mxu0 %v325
    %v529 = vpop.f32.mrb[0].mxu0
    %v530 = vadd.f32 0.0, %v529
    %v531 = vpop.f32.mrb[0].mxu0
    %532 = vmatprep.mubr.f32.mxu0 %v331
    %533 = vmatmul.mubr.f32.gmra.mrb[0].mxu0 %v326
    %v534 = vpop.f32.mrb[0].mxu0
    %v535 = vadd.f32 0.0, %v534
    %v536 = vpop.f32.mrb[0].mxu0
    %537 = vdwg.mxu0
    %538 = vmatprep.subr.mxu0 0.0
    %539 = vmatpush1.msra.mxu0 %v384
    %540 = vmatprep.subr.mxu0 0.0
    %541 = vmatpush1.msra.mxu0 %v385
    %542 = vmatprep.subr.mxu0 0.0
    %543 = vmatpush1.msra.mxu0 %v386
    %544 = vmatprep.subr.mxu0 0.0
    %545 = vmatpush1.msra.mxu0 %v387
    %546 = vmatprep.subr.mxu0 0.0
    %547 = vmatpush1.msra.mxu0 %v388
    %548 = vmatprep.subr.mxu0 0.0
    %549 = vmatpush1.msra.mxu0 %v389
    %550 = vmatprep.subr.mxu0 0.0
    %551 = vmatpush1.msra.mxu0 %v390
    %552 = vmatprep.subr.mxu0 0.0
    %553 = vmatpush1.msra.mxu0 %v391
    %554 = vmatprep.subr.mxu0 0.0
    %555 = vmatpush1.msra.mxu0 %v392
    %556 = vmatprep.subr.mxu0 0.0
    %557 = vmatpush1.msra.mxu0 %v393
    %558 = vmatprep.subr.mxu0 0.0
    %559 = vmatpush1.msra.mxu0 %v394
    %560 = vmatprep.subr.mxu0 0.0
    %561 = vmatpush1.msra.mxu0 %v395
    %562 = vmatprep.subr.mxu0 0.0
    %563 = vmatpush1.msra.mxu0 %v396
    %564 = vmatprep.subr.mxu0 0.0
    %565 = vmatpush1.msra.mxu0 %v397
    %566 = vmatprep.subr.mxu0 0.0
    %567 = vmatpush1.msra.mxu0 %v398
    %568 = vmatprep.subr.mxu0 0.0
    %569 = vmatpush1.msra.mxu0 %v399
    %570 = vmatprep.subr.mxu0 0.0
    %571 = vmatpush1.msra.mxu0 %v400
    %572 = vmatprep.subr.mxu0 0.0
    %573 = vmatpush1.msra.mxu0 %v401
    %574 = vmatprep.subr.mxu0 0.0
    %575 = vmatpush1.msra.mxu0 %v402
    %576 = vmatprep.subr.mxu0 0.0
    %577 = vmatpush1.msra.mxu0 %v403
    %578 = vmatprep.subr.mxu0 0.0
    %579 = vmatpush1.msra.mxu0 %v404
    %580 = vmatprep.subr.mxu0 0.0
    %581 = vmatpush1.msra.mxu0 %v405
    %582 = vmatprep.subr.mxu0 0.0
    %583 = vmatpush1.msra.mxu0 %v406
    %584 = vmatprep.subr.mxu0 0.0
    %585 = vmatpush1.msra.mxu0 %v407
    %586 = vmatprep.subr.mxu0 0.0
    %587 = vmatpush1.msra.mxu0 %v408
    %588 = vmatprep.subr.mxu0 0.0
    %589 = vmatpush1.msra.mxu0 %v409
    %590 = vmatprep.subr.mxu0 0.0
    %591 = vmatpush1.msra.mxu0 %v410
    %592 = vmatprep.subr.mxu0 0.0
    %593 = vmatpush1.msra.mxu0 %v411
    %594 = vmatprep.subr.mxu0 0.0
    %595 = vmatpush1.msra.mxu0 %v412
    %596 = vmatprep.subr.mxu0 0.0
    %597 = vmatpush1.msra.mxu0 %v413
    %598 = vmatprep.subr.mxu0 0.0
    %599 = vmatpush1.msra.mxu0 %v414
    %600 = vmatprep.subr.mxu0 0.0
    %601 = vmatpush1.msra.mxu0 %v415
    %602 = vmatprep.mubr.f32.mxu0 %v337
    %603 = vmatmul.mubr.f32.gmra.mrb[0].mxu0 %v332
    %v604 = vpop.f32.mrb[0].mxu0
    %v605 = vadd.f32 %v515, %v604
    %v606 = vpop.f32.mrb[0].mxu0
    %607 = vmatprep.mubr.f32.mxu0 %v338
    %608 = vmatmul.mubr.f32.gmra.mrb[0].mxu0 %v333
    %v609 = vpop.f32.mrb[0].mxu0
    %v610 = vadd.f32 %v520, %v609
    %v611 = vpop.f32.mrb[0].mxu0
    %612 = vmatprep.mubr.f32.mxu0 %v339
    %613 = vmatmul.mubr.f32.gmra.mrb[0].mxu0 %v334
    %v614 = vpop.f32.mrb[0].mxu0
    %v615 = vadd.f32 %v525, %v614
    %v616 = vpop.f32.mrb[0].mxu0
    %617 = vmatprep.mubr.f32.mxu0 %v340
    %618 = vmatmul.mubr.f32.gmra.mrb[0].mxu0 %v335
    %v619 = vpop.f32.mrb[0].mxu0
    %v620 = vadd.f32 %v530, %v619
    %v621 = vpop.f32.mrb[0].mxu0
    %622 = vmatprep.mubr.f32.mxu0 %v341
    %623 = vmatmul.mubr.f32.gmra.mrb[0].mxu0 %v336
    %v624 = vpop.f32.mrb[0].mxu0
    %v625 = vadd.f32 %v535, %v624
    %v626 = vpop.f32.mrb[0].mxu0
    %627 = vdwg.mxu0
    %628 = vmatprep.subr.mxu0 0.0
    %629 = vmatpush1.msra.mxu0 %v416
    %630 = vmatprep.subr.mxu0 0.0
    %631 = vmatpush1.msra.mxu0 %v417
    %632 = vmatprep.subr.mxu0 0.0
    %633 = vmatpush1.msra.mxu0 %v418
    %634 = vmatprep.subr.mxu0 0.0
    %635 = vmatpush1.msra.mxu0 %v419
    %636 = vmatprep.subr.mxu0 0.0
    %637 = vmatpush1.msra.mxu0 %v420
    %638 = vmatprep.subr.mxu0 0.0
    %639 = vmatpush1.msra.mxu0 %v421
    %640 = vmatprep.subr.mxu0 0.0
    %641 = vmatpush1.msra.mxu0 %v422
    %642 = vmatprep.subr.mxu0 0.0
    %643 = vmatpush1.msra.mxu0 %v423
    %644 = vmatprep.subr.mxu0 0.0
    %645 = vmatpush1.msra.mxu0 %v424
    %646 = vmatprep.subr.mxu0 0.0
    %647 = vmatpush1.msra.mxu0 %v425
    %648 = vmatprep.subr.mxu0 0.0
    %649 = vmatpush1.msra.mxu0 %v426
    %650 = vmatprep.subr.mxu0 0.0
    %651 = vmatpush1.msra.mxu0 %v427
    %652 = vmatprep.subr.mxu0 0.0
    %653 = vmatpush1.msra.mxu0 %v428
    %654 = vmatprep.subr.mxu0 0.0
    %655 = vmatpush1.msra.mxu0 %v429
    %656 = vmatprep.subr.mxu0 0.0
    %657 = vmatpush1.msra.mxu0 %v430
    %658 = vmatprep.subr.mxu0 0.0
    %659 = vmatpush1.msra.mxu0 %v431
    %660 = vmatprep.subr.mxu0 0.0
    %661 = vmatpush1.msra.mxu0 %v432
    %662 = vmatprep.subr.mxu0 0.0
    %663 = vmatpush1.msra.mxu0 %v433
    %664 = vmatprep.subr.mxu0 0.0
    %665 = vmatpush1.msra.mxu0 %v434
    %666 = vmatprep.subr.mxu0 0.0
    %667 = vmatpush1.msra.mxu0 %v435
    %668 = vmatprep.subr.mxu0 0.0
    %669 = vmatpush1.msra.mxu0 %v436
    %670 = vmatprep.subr.mxu0 0.0
    %671 = vmatpush1.msra.mxu0 %v437
    %672 = vmatprep.subr.mxu0 0.0
    %673 = vmatpush1.msra.mxu0 %v438
    %674 = vmatprep.subr.mxu0 0.0
    %675 = vmatpush1.msra.mxu0 %v439
    %676 = vmatprep.subr.mxu0 0.0
    %677 = vmatpush1.msra.mxu0 %v440
    %678 = vmatprep.subr.mxu0 0.0
    %679 = vmatpush1.msra.mxu0 %v441
    %680 = vmatprep.subr.mxu0 0.0
    %681 = vmatpush1.msra.mxu0 %v442
    %682 = vmatprep.subr.mxu0 0.0
    %683 = vmatpush1.msra.mxu0 %v443
    %684 = vmatprep.subr.mxu0 0.0
    %685 = vmatpush1.msra.mxu0 %v444
    %686 = vmatprep.subr.mxu0 0.0
    %687 = vmatpush1.msra.mxu0 %v445
    %688 = vmatprep.subr.mxu0 0.0
    %689 = vmatpush1.msra.mxu0 %v446
    %690 = vmatprep.subr.mxu0 0.0
    %691 = vmatpush1.msra.mxu0 %v447
    %692 = vmatprep.mubr.f32.mxu0 %v347
    %693 = vmatmul.mubr.f32.gmra.mrb[0].mxu0 %v342
    %v694 = vpop.f32.mrb[0].mxu0
    %v695 = vadd.f32 %v605, %v694
    %v696 = vpop.f32.mrb[0].mxu0
    %697 = vmatprep.mubr.f32.mxu0 %v348
    %698 = vmatmul.mubr.f32.gmra.mrb[0].mxu0 %v343
    %v699 = vpop.f32.mrb[0].mxu0
    %v700 = vadd.f32 %v610, %v699
    %v701 = vpop.f32.mrb[0].mxu0
    %702 = vmatprep.mubr.f32.mxu0 %v349
    %703 = vmatmul.mubr.f32.gmra.mrb[0].mxu0 %v344
    %v704 = vpop.f32.mrb[0].mxu0
    %v705 = vadd.f32 %v615, %v704
    %v706 = vpop.f32.mrb[0].mxu0
    %707 = vmatprep.mubr.f32.mxu0 %v350
    %708 = vmatmul.mubr.f32.gmra.mrb[0].mxu0 %v345
    %v709 = vpop.f32.mrb[0].mxu0
    %v710 = vadd.f32 %v620, %v709
    %v711 = vpop.f32.mrb[0].mxu0
    %712 = vmatprep.mubr.f32.mxu0 %v351
    %713 = vmatmul.mubr.f32.gmra.mrb[0].mxu0 %v346
    %v714 = vpop.f32.mrb[0].mxu0
    %v715 = vadd.f32 %v625, %v714
    %v716 = vpop.f32.mrb[0].mxu0
    %717 = vdwg.mxu0
    %v718 = vmax.f32 %v695, 0.0
    %v719 = vmax.f32 %v700, 0.0
    %v720 = vmax.f32 %v705, 0.0
    %v721 = vmax.f32 %v710, 0.0
    %v722 = vmax.f32 %v715, 0.0
    %v723 = vmul.f32 %v718, %v285
    %v724 = vmul.f32 %v719, %v290
    %v725 = vmul.f32 %v720, %v295
    %v726 = vmul.f32 %v721, %v300
    %v727 = vmul.f32 %v722, %v305
    %v728 = vadd.f32 %v723, %v724
    %v729 = vadd.f32 %v728, %v725
    %v730 = vadd.f32 %v729, %v726
    %vm731 = vcmask 1040384
    %v732 = vsel %vm731, %v727, 0.0
    %v733 = vadd.f32 %v730, %v732
    %v734 = vrot.slane %v733, 4
    %v735 = vadd.f32 %v733, %v734
    %v736 = vrot.slane %v735, 2
    %v737 = vadd.f32 %v735, %v736
    %v738 = vrot.slane %v737, 1
    %v739 = vadd.f32 %v737, %v738
    %v740 = vmul.f32 %v723, %v723
    %v741 = vmul.f32 %v724, %v724
    %v742 = vmul.f32 %v725, %v725
    %v743 = vmul.f32 %v726, %v726
    %v744 = vmul.f32 %v727, %v727
    %v745 = vadd.f32 %v740, %v741
    %v746 = vadd.f32 %v745, %v742
    %v747 = vadd.f32 %v746, %v743
    %v748 = vsel %vm731, %v744, 0.0
    %v749 = vadd.f32 %v747, %v748
    %v750 = vrot.slane %v749, 4
    %v751 = vadd.f32 %v749, %v750
    %v752 = vrot.slane %v751, 2
    %v753 = vadd.f32 %v751, %v752
    %v754 = vrot.slane %v753, 1
    %v755 = vadd.f32 %v753, %v754
    %v756 = vsel %vm731, %v739, %v755
    %v757 = vld [vmem:[#allocation11] sm:$0xff]
    %v758 = vld [vmem:[#allocation11 + $0x8] sm:$0xff]
    %v759 = vld [vmem:[#allocation11 + $0x10] sm:$0xff]
    %v760 = vld [vmem:[#allocation11 + $0x18] sm:$0xff]
    %v761 = vld [vmem:[#allocation11 + $0x20] sm:$0xff]
    %v762 = vld [vmem:[#allocation11 + $0x28] sm:$0xff]
    %v763 = vld [vmem:[#allocation11 + $0x30] sm:$0xff]
    %v764 = vld [vmem:[#allocation11 + $0x38] sm:$0xff]
    %v765 = vld [vmem:[#allocation11 + $0x40] sm:$0xff]
    %v766 = vld [vmem:[#allocation11 + $0x48] sm:$0xff]
    %v767 = vld [vmem:[#allocation11 + $0x50] sm:$0xff]
    %v768 = vld [vmem:[#allocation11 + $0x58] sm:$0xff]
    %v769 = vld [vmem:[#allocation11 + $0x60] sm:$0xff]
    %v770 = vld [vmem:[#allocation11 + $0x68] sm:$0xff]
    %v771 = vld [vmem:[#allocation11 + $0x70] sm:$0xff]
    %v772 = vld [vmem:[#allocation11 + $0x78] sm:$0xff]
    %773 = vmatprep.subr.mxu0 0.0
    %774 = vmatpush1.msra.mxu0 %v757
    %775 = vmatprep.subr.mxu0 0.0
    %776 = vmatpush1.msra.mxu0 %v758
    %777 = vmatprep.subr.mxu0 0.0
    %778 = vmatpush1.msra.mxu0 %v759
    %779 = vmatprep.subr.mxu0 0.0
    %780 = vmatpush1.msra.mxu0 %v760
    %781 = vmatprep.subr.mxu0 0.0
    %782 = vmatpush1.msra.mxu0 %v761
    %783 = vmatprep.subr.mxu0 0.0
    %784 = vmatpush1.msra.mxu0 %v762
    %785 = vmatprep.subr.mxu0 0.0
    %786 = vmatpush1.msra.mxu0 %v763
    %787 = vmatprep.subr.mxu0 0.0
    %788 = vmatpush1.msra.mxu0 %v764
    %789 = vmatprep.subr.mxu0 0.0
    %790 = vmatpush1.msra.mxu0 %v765
    %791 = vmatprep.subr.mxu0 0.0
    %792 = vmatpush1.msra.mxu0 %v766
    %793 = vmatprep.subr.mxu0 0.0
    %794 = vmatpush1.msra.mxu0 %v767
    %795 = vmatprep.subr.mxu0 0.0
    %796 = vmatpush1.msra.mxu0 %v768
    %797 = vmatprep.subr.mxu0 0.0
    %798 = vmatpush1.msra.mxu0 %v769
    %799 = vmatprep.subr.mxu0 0.0
    %800 = vmatpush1.msra.mxu0 %v770
    %801 = vmatprep.subr.mxu0 0.0
    %802 = vmatpush1.msra.mxu0 %v771
    %803 = vmatprep.subr.mxu0 0.0
    %804 = vmatpush1.msra.mxu0 %v772
    %805 = vmatprep.subr.mxu0 0.0
    %806 = vmatpush1.msra.mxu0 0.0
    %807 = vmatprep.subr.mxu0 0.0
    %808 = vmatpush1.msra.mxu0 0.0
    %809 = vmatprep.subr.mxu0 0.0
    %810 = vmatpush1.msra.mxu0 0.0
    %811 = vmatprep.subr.mxu0 0.0
    %812 = vmatpush1.msra.mxu0 0.0
    %813 = vmatprep.subr.mxu0 0.0
    %814 = vmatpush1.msra.mxu0 0.0
    %815 = vmatprep.subr.mxu0 0.0
    %816 = vmatpush1.msra.mxu0 0.0
    %817 = vmatprep.subr.mxu0 0.0
    %818 = vmatpush1.msra.mxu0 0.0
    %819 = vmatprep.subr.mxu0 0.0
    %820 = vmatpush1.msra.mxu0 0.0
    %821 = vmatprep.subr.mxu0 0.0
    %822 = vmatpush1.msra.mxu0 0.0
    %823 = vmatprep.subr.mxu0 0.0
    %824 = vmatpush1.msra.mxu0 0.0
    %825 = vmatprep.subr.mxu0 0.0
    %826 = vmatpush1.msra.mxu0 0.0
    %827 = vmatprep.subr.mxu0 0.0
    %828 = vmatpush1.msra.mxu0 0.0
    %829 = vmatprep.subr.mxu0 0.0
    %830 = vmatpush1.msra.mxu0 0.0
    %831 = vmatprep.subr.mxu0 0.0
    %832 = vmatpush1.msra.mxu0 0.0
    %833 = vmatprep.subr.mxu0 0.0
    %834 = vmatpush1.msra.mxu0 0.0
    %835 = vmatprep.subr.mxu0 0.0
    %836 = vmatpush1.msra.mxu0 0.0
    %837 = vmatprep.mubr.f32.mxu0 0.0
    %838 = vmatmul.mubr.f32.gmra.mrb[0].mxu0 %v756
    %v839 = vpop.f32.mrb[0].mxu0
    %v840 = vadd.f32 0.0, %v839
    %v841 = vpop.f32.mrb[0].mxu0
    %842 = vdwg.mxu0
    %v843 = vmul.f32 %v840, 0.001953125
    %v844 = vmul.f32 %v843, %v843
    %v846 = vrot.slane %v844, 7
    %v848 = vsub.f32 %v843, %v846
    %v849 = vlaneseq
    %v850 = vshrl.u32 %v849, 7
    %v851 = vsub.s32 0, %v850
    %v852 = vrot.slane %v843, %v851
    %v853 = vsub.f32 %v723, %v852
    %v854 = vsub.f32 %v724, %v852
    %v855 = vsub.f32 %v725, %v852
    %v856 = vsub.f32 %v726, %v852
    %v857 = vsub.f32 %v727, %v852
    %v858 = vadd.f32 %v848, 1e-05
    %v859 = vrsqrt.pop %v858
    %v860 = vld [vmem:[%s7] sm:$0x1]
    %v862 = vlaneseq
    %v863 = vshrl.u32 %v862, 7
    %v864 = vsub.s32 0, %v863
    %v865 = vrot.slane %v860, %v864
    %v867 = vmul.f32 %v859, %v865
    %v868 = vlaneseq
    %v869 = vshrl.u32 %v868, 7
    %v870 = vsub.s32 1, %v869
    %v871 = vrot.slane %v867, %v870
    %v872 = vmul.f32 %v853, %v871
    %v873 = vmul.f32 %v854, %v871
    %v874 = vmul.f32 %v855, %v871
    %v875 = vmul.f32 %v856, %v871
    %v876 = vmul.f32 %v857, %v871
    %v877 = vld [vmem:[%s8] sm:$0x1]
    %v879 = vlaneseq
    %v880 = vshrl.u32 %v879, 7
    %v881 = vsub.s32 0, %v880
    %v882 = vrot.slane %v877, %v881
    %v884 = vadd.f32 %v872, %v882
    %v885 = vadd.f32 %v873, %v882
    %v886 = vadd.f32 %v874, %v882
    %v887 = vadd.f32 %v875, %v882
    %v888 = vadd.f32 %v876, %v882
    %v889 = vmul.f32 %v884, %v285
    %v890 = vmul.f32 %v885, %v290
    %v891 = vmul.f32 %v886, %v295
    %v892 = vmul.f32 %v887, %v300
    %v893 = vmul.f32 %v888, %v305
    %894 = vst [vmem:[#allocation2 + $0x1] sm:$0xff] %v889
    %895 = vst [vmem:[#allocation2 + $0x9] sm:$0xff] %v890
    %896 = vst [vmem:[#allocation2 + $0x11] sm:$0xff] %v891
    %897 = vst [vmem:[#allocation2 + $0x19] sm:$0xff] %v892
    %898 = vst [vmem:[#allocation2 + $0x21] sm:$0x1] %v893
    %v899 = vld [vmem:[#allocation2] sm:$0xff]
    %v900 = vld [vmem:[#allocation2 + $0x8] sm:$0xff]
    %v901 = vld [vmem:[#allocation2 + $0x10] sm:$0xff]
    %v902 = vld [vmem:[#allocation2 + $0x18] sm:$0xff]
    %v903 = vld [vmem:[#allocation2 + $0x20] sm:$0x1]
    %v904 = vld [vmem:[#allocation2 + $0x1] sm:$0xff]
    %v905 = vld [vmem:[#allocation2 + $0x9] sm:$0xff]
    %v906 = vld [vmem:[#allocation2 + $0x11] sm:$0xff]
    %v907 = vld [vmem:[#allocation2 + $0x19] sm:$0xff]
    %v908 = vld [vmem:[#allocation2 + $0x21] sm:$0x1]
    %v909 = vld [vmem:[#allocation2 + $0x2] sm:$0xff]
    %v910 = vld [vmem:[#allocation2 + $0xa] sm:$0xff]
    %v911 = vld [vmem:[#allocation2 + $0x12] sm:$0xff]
    %v912 = vld [vmem:[#allocation2 + $0x1a] sm:$0xff]
    %v913 = vld [vmem:[#allocation2 + $0x22] sm:$0x1]
    %v914 = vld [vmem:[#allocation9] sm:$0xff]
    %v915 = vld [vmem:[#allocation9 + $0x8] sm:$0xff]
    %v916 = vld [vmem:[#allocation9 + $0x10] sm:$0xff]
    %v917 = vld [vmem:[#allocation9 + $0x18] sm:$0xff]
    %v918 = vld [vmem:[#allocation9 + $0x20] sm:$0xff]
    %v919 = vld [vmem:[#allocation9 + $0x28] sm:$0xff]
    %v920 = vld [vmem:[#allocation9 + $0x30] sm:$0xff]
    %v921 = vld [vmem:[#allocation9 + $0x38] sm:$0xff]
    %v922 = vld [vmem:[#allocation9 + $0x40] sm:$0xff]
    %v923 = vld [vmem:[#allocation9 + $0x48] sm:$0xff]
    %v924 = vld [vmem:[#allocation9 + $0x50] sm:$0xff]
    %v925 = vld [vmem:[#allocation9 + $0x58] sm:$0xff]
    %v926 = vld [vmem:[#allocation9 + $0x60] sm:$0xff]
    %v927 = vld [vmem:[#allocation9 + $0x68] sm:$0xff]
    %v928 = vld [vmem:[#allocation9 + $0x70] sm:$0xff]
    %v929 = vld [vmem:[#allocation9 + $0x78] sm:$0xff]
    %v930 = vld [vmem:[#allocation9 + $0x80] sm:$0xff]
    %v931 = vld [vmem:[#allocation9 + $0x88] sm:$0xff]
    %v932 = vld [vmem:[#allocation9 + $0x90] sm:$0xff]
    %v933 = vld [vmem:[#allocation9 + $0x98] sm:$0xff]
    %v934 = vld [vmem:[#allocation9 + $0xa0] sm:$0xff]
    %v935 = vld [vmem:[#allocation9 + $0xa8] sm:$0xff]
    %v936 = vld [vmem:[#allocation9 + $0xb0] sm:$0xff]
    %v937 = vld [vmem:[#allocation9 + $0xb8] sm:$0xff]
    %v938 = vld [vmem:[#allocation9 + $0xc0] sm:$0xff]
    %v939 = vld [vmem:[#allocation9 + $0xc8] sm:$0xff]
    %v940 = vld [vmem:[#allocation9 + $0xd0] sm:$0xff]
    %v941 = vld [vmem:[#allocation9 + $0xd8] sm:$0xff]
    %v942 = vld [vmem:[#allocation9 + $0xe0] sm:$0xff]
    %v943 = vld [vmem:[#allocation9 + $0xe8] sm:$0xff]
    %v944 = vld [vmem:[#allocation9 + $0xf0] sm:$0xff]
    %v945 = vld [vmem:[#allocation9 + $0xf8] sm:$0xff]
    %v946 = vld [vmem:[#allocation9 + $0x100] sm:$0xff]
    %v947 = vld [vmem:[#allocation9 + $0x108] sm:$0xff]
    %v948 = vld [vmem:[#allocation9 + $0x110] sm:$0xff]
    %v949 = vld [vmem:[#allocation9 + $0x118] sm:$0xff]
    %v950 = vld [vmem:[#allocation9 + $0x120] sm:$0xff]
    %v951 = vld [vmem:[#allocation9 + $0x128] sm:$0xff]
    %v952 = vld [vmem:[#allocation9 + $0x130] sm:$0xff]
    %v953 = vld [vmem:[#allocation9 + $0x138] sm:$0xff]
    %v954 = vld [vmem:[#allocation9 + $0x140] sm:$0xff]
    %v955 = vld [vmem:[#allocation9 + $0x148] sm:$0xff]
    %v956 = vld [vmem:[#allocation9 + $0x150] sm:$0xff]
    %v957 = vld [vmem:[#allocation9 + $0x158] sm:$0xff]
    %v958 = vld [vmem:[#allocation9 + $0x160] sm:$0xff]
    %v959 = vld [vmem:[#allocation9 + $0x168] sm:$0xff]
    %v960 = vld [vmem:[#allocation9 + $0x170] sm:$0xff]
    %v961 = vld [vmem:[#allocation9 + $0x178] sm:$0xff]
    %962 = vmatprep.subr.mxu0 0.0
    %963 = vmatpush1.msra.mxu0 %v914
    %964 = vmatprep.subr.mxu0 0.0
    %965 = vmatpush1.msra.mxu0 %v915
    %966 = vmatprep.subr.mxu0 0.0
    %967 = vmatpush1.msra.mxu0 %v916
    %968 = vmatprep.subr.mxu0 0.0
    %969 = vmatpush1.msra.mxu0 %v917
    %970 = vmatprep.subr.mxu0 0.0
    %971 = vmatpush1.msra.mxu0 %v918
    %972 = vmatprep.subr.mxu0 0.0
    %973 = vmatpush1.msra.mxu0 %v919
    %974 = vmatprep.subr.mxu0 0.0
    %975 = vmatpush1.msra.mxu0 %v920
    %976 = vmatprep.subr.mxu0 0.0
    %977 = vmatpush1.msra.mxu0 %v921
    %978 = vmatprep.subr.mxu0 0.0
    %979 = vmatpush1.msra.mxu0 %v922
    %980 = vmatprep.subr.mxu0 0.0
    %981 = vmatpush1.msra.mxu0 %v923
    %982 = vmatprep.subr.mxu0 0.0
    %983 = vmatpush1.msra.mxu0 %v924
    %984 = vmatprep.subr.mxu0 0.0
    %985 = vmatpush1.msra.mxu0 %v925
    %986 = vmatprep.subr.mxu0 0.0
    %987 = vmatpush1.msra.mxu0 %v926
    %988 = vmatprep.subr.mxu0 0.0
    %989 = vmatpush1.msra.mxu0 %v927
    %990 = vmatprep.subr.mxu0 0.0
    %991 = vmatpush1.msra.mxu0 %v928
    %992 = vmatprep.subr.mxu0 0.0
    %993 = vmatpush1.msra.mxu0 %v929
    %994 = vmatprep.subr.mxu0 0.0
    %995 = vmatpush1.msra.mxu0 %v930
    %996 = vmatprep.subr.mxu0 0.0
    %997 = vmatpush1.msra.mxu0 %v931
    %998 = vmatprep.subr.mxu0 0.0
    %999 = vmatpush1.msra.mxu0 %v932
    %1000 = vmatprep.subr.mxu0 0.0
    %1001 = vmatpush1.msra.mxu0 %v933
    %1002 = vmatprep.subr.mxu0 0.0
    %1003 = vmatpush1.msra.mxu0 %v934
    %1004 = vmatprep.subr.mxu0 0.0
    %1005 = vmatpush1.msra.mxu0 %v935
    %1006 = vmatprep.subr.mxu0 0.0
    %1007 = vmatpush1.msra.mxu0 %v936
    %1008 = vmatprep.subr.mxu0 0.0
    %1009 = vmatpush1.msra.mxu0 %v937
    %1010 = vmatprep.subr.mxu0 0.0
    %1011 = vmatpush1.msra.mxu0 %v938
    %1012 = vmatprep.subr.mxu0 0.0
    %1013 = vmatpush1.msra.mxu0 %v939
    %1014 = vmatprep.subr.mxu0 0.0
    %1015 = vmatpush1.msra.mxu0 %v940
    %1016 = vmatprep.subr.mxu0 0.0
    %1017 = vmatpush1.msra.mxu0 %v941
    %1018 = vmatprep.subr.mxu0 0.0
    %1019 = vmatpush1.msra.mxu0 %v942
    %1020 = vmatprep.subr.mxu0 0.0
    %1021 = vmatpush1.msra.mxu0 %v943
    %1022 = vmatprep.subr.mxu0 0.0
    %1023 = vmatpush1.msra.mxu0 %v944
    %1024 = vmatprep.subr.mxu0 0.0
    %1025 = vmatpush1.msra.mxu0 %v945
    %1026 = vmatprep.mubr.f32.mxu0 %v904
    %1027 = vmatmul.mubr.f32.gmra.mrb[0].mxu0 %v899
    %v1028 = vpop.f32.mrb[0].mxu0
    %v1029 = vadd.f32 0.0, %v1028
    %v1030 = vpop.f32.mrb[0].mxu0
    %1031 = vmatprep.mubr.f32.mxu0 %v905
    %1032 = vmatmul.mubr.f32.gmra.mrb[0].mxu0 %v900
    %v1033 = vpop.f32.mrb[0].mxu0
    %v1034 = vadd.f32 0.0, %v1033
    %v1035 = vpop.f32.mrb[0].mxu0
    %1036 = vmatprep.mubr.f32.mxu0 %v906
    %1037 = vmatmul.mubr.f32.gmra.mrb[0].mxu0 %v901
    %v1038 = vpop.f32.mrb[0].mxu0
    %v1039 = vadd.f32 0.0, %v1038
    %v1040 = vpop.f32.mrb[0].mxu0
    %1041 = vmatprep.mubr.f32.mxu0 %v907
    %1042 = vmatmul.mubr.f32.gmra.mrb[0].mxu0 %v902
    %v1043 = vpop.f32.mrb[0].mxu0
    %v1044 = vadd.f32 0.0, %v1043
    %v1045 = vpop.f32.mrb[0].mxu0
    %1046 = vmatprep.mubr.f32.mxu0 %v908
    %1047 = vmatmul.mubr.f32.gmra.mrb[0].mxu0 %v903
    %v1048 = vpop.f32.mrb[0].mxu0
    %v1049 = vadd.f32 0.0, %v1048
    %v1050 = vpop.f32.mrb[0].mxu0
    %1051 = vdwg.mxu0
    %1052 = vmatprep.subr.mxu0 0.0
    %1053 = vmatpush1.msra.mxu0 %v946
    %1054 = vmatprep.subr.mxu0 0.0
    %1055 = vmatpush1.msra.mxu0 %v947
    %1056 = vmatprep.subr.mxu0 0.0
    %1057 = vmatpush1.msra.mxu0 %v948
    %1058 = vmatprep.subr.mxu0 0.0
    %1059 = vmatpush1.msra.mxu0 %v949
    %1060 = vmatprep.subr.mxu0 0.0
    %1061 = vmatpush1.msra.mxu0 %v950
    %1062 = vmatprep.subr.mxu0 0.0
    %1063 = vmatpush1.msra.mxu0 %v951
    %1064 = vmatprep.subr.mxu0 0.0
    %1065 = vmatpush1.msra.mxu0 %v952
    %1066 = vmatprep.subr.mxu0 0.0
    %1067 = vmatpush1.msra.mxu0 %v953
    %1068 = vmatprep.subr.mxu0 0.0
    %1069 = vmatpush1.msra.mxu0 %v954
    %1070 = vmatprep.subr.mxu0 0.0
    %1071 = vmatpush1.msra.mxu0 %v955
    %1072 = vmatprep.subr.mxu0 0.0
    %1073 = vmatpush1.msra.mxu0 %v956
    %1074 = vmatprep.subr.mxu0 0.0
    %1075 = vmatpush1.msra.mxu0 %v957
    %1076 = vmatprep.subr.mxu0 0.0
    %1077 = vmatpush1.msra.mxu0 %v958
    %1078 = vmatprep.subr.mxu0 0.0
    %1079 = vmatpush1.msra.mxu0 %v959
    %1080 = vmatprep.subr.mxu0 0.0
    %1081 = vmatpush1.msra.mxu0 %v960
    %1082 = vmatprep.subr.mxu0 0.0
    %1083 = vmatpush1.msra.mxu0 %v961
    %1084 = vmatprep.subr.mxu0 0.0
    %1085 = vmatpush1.msra.mxu0 0.0
    %1086 = vmatprep.subr.mxu0 0.0
    %1087 = vmatpush1.msra.mxu0 0.0
    %1088 = vmatprep.subr.mxu0 0.0
    %1089 = vmatpush1.msra.mxu0 0.0
    %1090 = vmatprep.subr.mxu0 0.0
    %1091 = vmatpush1.msra.mxu0 0.0
    %1092 = vmatprep.subr.mxu0 0.0
    %1093 = vmatpush1.msra.mxu0 0.0
    %1094 = vmatprep.subr.mxu0 0.0
    %1095 = vmatpush1.msra.mxu0 0.0
    %1096 = vmatprep.subr.mxu0 0.0
    %1097 = vmatpush1.msra.mxu0 0.0
    %1098 = vmatprep.subr.mxu0 0.0
    %1099 = vmatpush1.msra.mxu0 0.0
    %1100 = vmatprep.subr.mxu0 0.0
    %1101 = vmatpush1.msra.mxu0 0.0
    %1102 = vmatprep.subr.mxu0 0.0
    %1103 = vmatpush1.msra.mxu0 0.0
    %1104 = vmatprep.subr.mxu0 0.0
    %1105 = vmatpush1.msra.mxu0 0.0
    %1106 = vmatprep.subr.mxu0 0.0
    %1107 = vmatpush1.msra.mxu0 0.0
    %1108 = vmatprep.subr.mxu0 0.0
    %1109 = vmatpush1.msra.mxu0 0.0
    %1110 = vmatprep.subr.mxu0 0.0
    %1111 = vmatpush1.msra.mxu0 0.0
    %1112 = vmatprep.subr.mxu0 0.0
    %1113 = vmatpush1.msra.mxu0 0.0
    %1114 = vmatprep.subr.mxu0 0.0
    %1115 = vmatpush1.msra.mxu0 0.0
    %1116 = vmatprep.mubr.f32.mxu0 0.0
    %1117 = vmatmul.mubr.f32.gmra.mrb[0].mxu0 %v909
    %v1118 = vpop.f32.mrb[0].mxu0
    %v1119 = vadd.f32 %v1029, %v1118
    %v1120 = vpop.f32.mrb[0].mxu0
    %1121 = vmatprep.mubr.f32.mxu0 0.0
    %1122 = vmatmul.mubr.f32.gmra.mrb[0].mxu0 %v910
    %v1123 = vpop.f32.mrb[0].mxu0
    %v1124 = vadd.f32 %v1034, %v1123
    %v1125 = vpop.f32.mrb[0].mxu0
    %1126 = vmatprep.mubr.f32.mxu0 0.0
    %1127 = vmatmul.mubr.f32.gmra.mrb[0].mxu0 %v911
    %v1128 = vpop.f32.mrb[0].mxu0
    %v1129 = vadd.f32 %v1039, %v1128
    %v1130 = vpop.f32.mrb[0].mxu0
    %1131 = vmatprep.mubr.f32.mxu0 0.0
    %1132 = vmatmul.mubr.f32.gmra.mrb[0].mxu0 %v912
    %v1133 = vpop.f32.mrb[0].mxu0
    %v1134 = vadd.f32 %v1044, %v1133
    %v1135 = vpop.f32.mrb[0].mxu0
    %1136 = vmatprep.mubr.f32.mxu0 0.0
    %1137 = vmatmul.mubr.f32.gmra.mrb[0].mxu0 %v913
    %v1138 = vpop.f32.mrb[0].mxu0
    %v1139 = vadd.f32 %v1049, %v1138
    %v1140 = vpop.f32.mrb[0].mxu0
    %1141 = vdwg.mxu0
    %v1142 = vmul.f32 %v1119, %v285
    %v1143 = vmul.f32 %v1124, %v290
    %v1144 = vmul.f32 %v1129, %v295
    %v1145 = vmul.f32 %v1134, %v300
    %v1146 = vmul.f32 %v1139, %v305
    %v1147 = vadd.f32 %v1142, %v1143
    %v1148 = vadd.f32 %v1147, %v1144
    %v1149 = vadd.f32 %v1148, %v1145
    %v1150 = vsel %vm731, %v1146, 0.0
    %v1151 = vadd.f32 %v1149, %v1150
    %v1152 = vrot.slane %v1151, 4
    %v1153 = vadd.f32 %v1151, %v1152
    %v1154 = vrot.slane %v1153, 2
    %v1155 = vadd.f32 %v1153, %v1154
    %v1156 = vrot.slane %v1155, 1
    %v1157 = vadd.f32 %v1155, %v1156
    %v1158 = vmul.f32 %v1142, %v1142
    %v1159 = vmul.f32 %v1143, %v1143
    %v1160 = vmul.f32 %v1144, %v1144
    %v1161 = vmul.f32 %v1145, %v1145
    %v1162 = vmul.f32 %v1146, %v1146
    %v1163 = vadd.f32 %v1158, %v1159
    %v1164 = vadd.f32 %v1163, %v1160
    %v1165 = vadd.f32 %v1164, %v1161
    %v1166 = vsel %vm731, %v1162, 0.0
    %v1167 = vadd.f32 %v1165, %v1166
    %v1168 = vrot.slane %v1167, 4
    %v1169 = vadd.f32 %v1167, %v1168
    %v1170 = vrot.slane %v1169, 2
    %v1171 = vadd.f32 %v1169, %v1170
    %v1172 = vrot.slane %v1171, 1
    %v1173 = vadd.f32 %v1171, %v1172
    %v1174 = vsel %vm731, %v1157, %v1173
    %v1175 = vld [vmem:[#allocation11] sm:$0xff]
    %v1176 = vld [vmem:[#allocation11 + $0x8] sm:$0xff]
    %v1177 = vld [vmem:[#allocation11 + $0x10] sm:$0xff]
    %v1178 = vld [vmem:[#allocation11 + $0x18] sm:$0xff]
    %v1179 = vld [vmem:[#allocation11 + $0x20] sm:$0xff]
    %v1180 = vld [vmem:[#allocation11 + $0x28] sm:$0xff]
    %v1181 = vld [vmem:[#allocation11 + $0x30] sm:$0xff]
    %v1182 = vld [vmem:[#allocation11 + $0x38] sm:$0xff]
    %v1183 = vld [vmem:[#allocation11 + $0x40] sm:$0xff]
    %v1184 = vld [vmem:[#allocation11 + $0x48] sm:$0xff]
    %v1185 = vld [vmem:[#allocation11 + $0x50] sm:$0xff]
    %v1186 = vld [vmem:[#allocation11 + $0x58] sm:$0xff]
    %v1187 = vld [vmem:[#allocation11 + $0x60] sm:$0xff]
    %v1188 = vld [vmem:[#allocation11 + $0x68] sm:$0xff]
    %v1189 = vld [vmem:[#allocation11 + $0x70] sm:$0xff]
    %v1190 = vld [vmem:[#allocation11 + $0x78] sm:$0xff]
    %1191 = vmatprep.subr.mxu0 0.0
    %1192 = vmatpush1.msra.mxu0 %v1175
    %1193 = vmatprep.subr.mxu0 0.0
    %1194 = vmatpush1.msra.mxu0 %v1176
    %1195 = vmatprep.subr.mxu0 0.0
    %1196 = vmatpush1.msra.mxu0 %v1177
    %1197 = vmatprep.subr.mxu0 0.0
    %1198 = vmatpush1.msra.mxu0 %v1178
    %1199 = vmatprep.subr.mxu0 0.0
    %1200 = vmatpush1.msra.mxu0 %v1179
    %1201 = vmatprep.subr.mxu0 0.0
    %1202 = vmatpush1.msra.mxu0 %v1180
    %1203 = vmatprep.subr.mxu0 0.0
    %1204 = vmatpush1.msra.mxu0 %v1181
    %1205 = vmatprep.subr.mxu0 0.0
    %1206 = vmatpush1.msra.mxu0 %v1182
    %1207 = vmatprep.subr.mxu0 0.0
    %1208 = vmatpush1.msra.mxu0 %v1183
    %1209 = vmatprep.subr.mxu0 0.0
    %1210 = vmatpush1.msra.mxu0 %v1184
    %1211 = vmatprep.subr.mxu0 0.0
    %1212 = vmatpush1.msra.mxu0 %v1185
    %1213 = vmatprep.subr.mxu0 0.0
    %1214 = vmatpush1.msra.mxu0 %v1186
    %1215 = vmatprep.subr.mxu0 0.0
    %1216 = vmatpush1.msra.mxu0 %v1187
    %1217 = vmatprep.subr.mxu0 0.0
    %1218 = vmatpush1.msra.mxu0 %v1188
    %1219 = vmatprep.subr.mxu0 0.0
    %1220 = vmatpush1.msra.mxu0 %v1189
    %1221 = vmatprep.subr.mxu0 0.0
    %1222 = vmatpush1.msra.mxu0 %v1190
    %1223 = vmatprep.subr.mxu0 0.0
    %1224 = vmatpush1.msra.mxu0 0.0
    %1225 = vmatprep.subr.mxu0 0.0
    %1226 = vmatpush1.msra.mxu0 0.0
    %1227 = vmatprep.subr.mxu0 0.0
    %1228 = vmatpush1.msra.mxu0 0.0
    %1229 = vmatprep.subr.mxu0 0.0
    %1230 = vmatpush1.msra.mxu0 0.0
    %1231 = vmatprep.subr.mxu0 0.0
    %1232 = vmatpush1.msra.mxu0 0.0
    %1233 = vmatprep.subr.mxu0 0.0
    %1234 = vmatpush1.msra.mxu0 0.0
    %1235 = vmatprep.subr.mxu0 0.0
    %1236 = vmatpush1.msra.mxu0 0.0
    %1237 = vmatprep.subr.mxu0 0.0
    %1238 = vmatpush1.msra.mxu0 0.0
    %1239 = vmatprep.subr.mxu0 0.0
    %1240 = vmatpush1.msra.mxu0 0.0
    %1241 = vmatprep.subr.mxu0 0.0
    %1242 = vmatpush1.msra.mxu0 0.0
    %1243 = vmatprep.subr.mxu0 0.0
    %1244 = vmatpush1.msra.mxu0 0.0
    %1245 = vmatprep.subr.mxu0 0.0
    %1246 = vmatpush1.msra.mxu0 0.0
    %1247 = vmatprep.subr.mxu0 0.0
    %1248 = vmatpush1.msra.mxu0 0.0
    %1249 = vmatprep.subr.mxu0 0.0
    %1250 = vmatpush1.msra.mxu0 0.0
    %1251 = vmatprep.subr.mxu0 0.0
    %1252 = vmatpush1.msra.mxu0 0.0
    %1253 = vmatprep.subr.mxu0 0.0
    %1254 = vmatpush1.msra.mxu0 0.0
    %1255 = vmatprep.mubr.f32.mxu0 0.0
    %1256 = vmatmul.mubr.f32.gmra.mrb[0].mxu0 %v1174
    %v1257 = vpop.f32.mrb[0].mxu0
    %v1258 = vadd.f32 0.0, %v1257
    %v1259 = vpop.f32.mrb[0].mxu0
    %1260 = vdwg.mxu0
    %v1261 = vmul.f32 %v1258, 0.001953125
    %v1262 = vmul.f32 %v1261, %v1261
    %v1264 = vrot.slane %v1262, 7
    %v1266 = vsub.f32 %v1261, %v1264
    %v1267 = vlaneseq
    %v1268 = vshrl.u32 %v1267, 7
    %v1269 = vsub.s32 0, %v1268
    %v1270 = vrot.slane %v1261, %v1269
    %v1271 = vsub.f32 %v1142, %v1270
    %v1272 = vsub.f32 %v1143, %v1270
    %v1273 = vsub.f32 %v1144, %v1270
    %v1274 = vsub.f32 %v1145, %v1270
    %v1275 = vsub.f32 %v1146, %v1270
    %v1276 = vadd.f32 %v1266, 1e-05
    %v1277 = vrsqrt.pop %v1276
    %v1278 = vld [vmem:[%s9] sm:$0x1]
    %v1280 = vlaneseq
    %v1281 = vshrl.u32 %v1280, 7
    %v1282 = vsub.s32 0, %v1281
    %v1283 = vrot.slane %v1278, %v1282
    %v1285 = vmul.f32 %v1277, %v1283
    %v1286 = vlaneseq
    %v1287 = vshrl.u32 %v1286, 7
    %v1288 = vsub.s32 1, %v1287
    %v1289 = vrot.slane %v1285, %v1288
    %v1290 = vmul.f32 %v1271, %v1289
    %v1291 = vmul.f32 %v1272, %v1289
    %v1292 = vmul.f32 %v1273, %v1289
    %v1293 = vmul.f32 %v1274, %v1289
    %v1294 = vmul.f32 %v1275, %v1289
    %v1295 = vld [vmem:[%s10] sm:$0x1]
    %v1297 = vlaneseq
    %v1298 = vshrl.u32 %v1297, 7
    %v1299 = vsub.s32 0, %v1298
    %v1300 = vrot.slane %v1295, %v1299
    %v1302 = vadd.f32 %v1290, %v1300
    %v1303 = vadd.f32 %v1291, %v1300
    %v1304 = vadd.f32 %v1292, %v1300
    %v1305 = vadd.f32 %v1293, %v1300
    %v1306 = vadd.f32 %v1294, %v1300
    %v1307 = vmax.f32 %v1302, 0.0
    %v1308 = vmax.f32 %v1303, 0.0
    %v1309 = vmax.f32 %v1304, 0.0
    %v1310 = vmax.f32 %v1305, 0.0
    %v1311 = vmax.f32 %v1306, 0.0
    %1312 = vst [vmem:[#allocation12] sm:$0xff] %v1307
    %1313 = vst [vmem:[#allocation12 + $0x8] sm:$0xff] %v1308
    %1314 = vst [vmem:[#allocation12 + $0x10] sm:$0xff] %v1309
    %1315 = vst [vmem:[#allocation12 + $0x18] sm:$0xff] %v1310
    %1316 = vst [vmem:[#allocation12 + $0x20] sm:$0x1] %v1311
    // Predicated region
    $region66: #{tpu_custom_call.1} parent=1 // pred_check
      _
    $region67: #{tpu_custom_call.1} parent=1 // pred_check_branch
      %1318 = sbr.rel (0) target = $region69
    $region68: #{tpu_custom_call.1} parent=1 // pred_region
      %s1320 = ssub.s32 640, 640
      %1321 = vsyncadd [#allocation5], %s1320
      %s1322 = sshll.u32 [#allocation12], 4
      %s1323 = int_to_ptr.vmem [resolvable:$true] %s1322
      %1328 = dma.vmem_to_hbm [thread:$0]  %s1323, 640, %s11, [#allocation5], 128, 128, 8
    $region69: #{tpu_custom_call.1} parent=1 // pred_fallthru
      _
    // Predicated region
    $region70: #{tpu_custom_call.1} parent=1 // pred_check
      _
    $region71: #{tpu_custom_call.1} parent=1 // pred_check_branch
      %1330 = sbr.rel (0) target = $region73
    $region72: #{tpu_custom_call.1} parent=1 // pred_region
      %1331 = dma.done [#allocation5], 640
    $region73: #{tpu_custom_call.1} parent=1 // pred_fallthru
      _
    %1332 = vsyncpa [#allocation4], 1
    %1333 = vsyncpa [#allocation7], 1
    %1334 = vsyncpa [#allocation10], 1
    %1335 = vsyncpa [#allocation5], 1

</llo_original>
